<compile_context>
chip_gen: v5e
topology: v5e:2x2
jax: 0.10.0
libtpu: 0.0.40
codegen_flags: <defaults>
</compile_context>

<pallas_src>
import functools

import jax
import jax.numpy as jnp
from jax import lax
from jax.experimental import pallas as pl
from jax.experimental.pallas import tpu as pltpu

LANE = 128


def _round_up(x, m):
    return ((x + m - 1) // m) * m


def _gru_cls_kernel(ids_ref,        # (B_pad, S) int32 in SMEM (scalar prefetch)
                    emb_ref,        # (V_pad, E_pad) f32 embedding table (VMEM resident)
                    w_i3_ref,       # (E_pad, 3*H_pad) bf16 fused input-gate weights (r|z|n)
                    b_i3_ref,       # (1, 3*H_pad) f32 combined biases (b_ir+b_hr | b_iz+b_hz | b_in)
                    b_hn_ref,       # (1, H_pad) f32 hidden bias of gate n (multiplied by r)
                    fc_w_ref,       # (H_pad, C_pad) bf16
                    fc_b_ref,       # (1, C_pad) f32
                    out_ref,        # (BM, C_pad) f32 logits for this batch tile
                    *, bm, seq_len, emb_pad, hidden_pad, inv_seq_len):
    i = pl.program_id(0)
    Hd = hidden_pad

    # ---- Embedding gather + mean, fully in VMEM (no per-token grid steps / DMAs). ----
    rows = []
    for j in range(bm):                               # static unroll over the batch tile
        b = i * bm + j                                # global (padded) sequence index

        def token_body(t, acc, b=b):
            tok = ids_ref[b, t]                       # scalar token id from SMEM
            return acc + emb_ref[pl.ds(tok, 1), :]    # dynamic-row gather of (1, E_pad)

        acc = lax.fori_loop(0, seq_len, token_body,
                            jnp.zeros((1, emb_pad), jnp.float32), unroll=True)
        rows.append(acc)
    x = jnp.concatenate(rows, axis=0) * inv_seq_len   # (BM, E_pad) f32 per-sequence means

    # ---- GRU step with h0 == 0: one fused 3-gate input matmul, no W_hh work. ----
    gates = jnp.dot(x.astype(w_i3_ref.dtype), w_i3_ref[...],
                    preferred_element_type=jnp.float32) + b_i3_ref[...]   # (BM, 3*H_pad)
    r = jax.nn.sigmoid(gates[:, 0:Hd])
    z = jax.nn.sigmoid(gates[:, Hd:2 * Hd])
    n = jnp.tanh(gates[:, 2 * Hd:3 * Hd] + r * b_hn_ref[...])
    h = (1.0 - z) * n                                  # (BM, H_pad) f32

    # ---- Classifier head. ----
    out_ref[...] = (jnp.dot(h.astype(fc_w_ref.dtype), fc_w_ref[...],
                            preferred_element_type=jnp.float32)
                    + fc_b_ref[...])                   # (BM, C_pad)


def pack_params(params):
    """One-time repack of PyTorch-style params into kernel-ready, lane-padded layout."""
    vocab, emb_dim = params["emb"].shape
    hidden = params["w_hh"].shape[1]
    num_classes = params["fc_w"].shape[0]

    E = _round_up(emb_dim, LANE)
    H = _round_up(hidden, LANE)
    C = _round_up(num_classes, LANE)
    V = _round_up(vocab, 8)                            # sublane-align the table rows

    f32, bf16 = jnp.float32, jnp.bfloat16

    # Embedding table: lane-padded, f32 (robust 32-bit dynamic-row gather path).
    emb_p = jnp.zeros((V, E), f32).at[:vocab, :emb_dim].set(params["emb"].astype(f32))

    w_ih = params["w_ih"].astype(f32)                  # (3H, E), gate order (r, z, n)
    b_ih = params["b_ih"].astype(f32)                  # (3H,)
    b_hh = params["b_hh"].astype(f32)                  # (3H,)

    # Fused input-gate weights, bf16 (halves DMA bytes; native MXU path).
    w_i3 = jnp.zeros((E, 3 * H), f32)
    for g in range(3):
        w_g = w_ih[g * hidden:(g + 1) * hidden].T      # (emb_dim, hidden)
        w_i3 = w_i3.at[:emb_dim, g * H:g * H + hidden].set(w_g)
    w_i3 = w_i3.astype(bf16)

    b_i3 = jnp.zeros((1, 3 * H), f32)
    b_i3 = b_i3.at[0, 0:hidden].set(b_ih[0:hidden] + b_hh[0:hidden])                        # r
    b_i3 = b_i3.at[0, H:H + hidden].set(b_ih[hidden:2 * hidden] + b_hh[hidden:2 * hidden])  # z
    b_i3 = b_i3.at[0, 2 * H:2 * H + hidden].set(b_ih[2 * hidden:3 * hidden])                # n (input)
    b_hn = jnp.zeros((1, H), f32).at[0, :hidden].set(b_hh[2 * hidden:3 * hidden])           # n (hidden, *r)

    fc_w = (jnp.zeros((H, C), f32)
            .at[:hidden, :num_classes].set(params["fc_w"].astype(f32).T)).astype(bf16)
    fc_b = jnp.zeros((1, C), f32).at[0, :num_classes].set(params["fc_b"].astype(f32))

    return {
        "emb": emb_p, "w_i3": w_i3, "b_i3": b_i3, "b_hn": b_hn,
        "fc_w": fc_w, "fc_b": fc_b,
        "dims": (hidden, num_classes, E, H, C),        # static metadata
    }


def _vmem_limit_bytes(packed, bm, c_pad):
    """Scoped-VMEM limit computed from actual packed buffer sizes (+ headroom)."""
    weight_bytes = sum(int(a.size) * int(a.dtype.itemsize)
                       for k, a in packed.items() if k != "dims")
    out_bytes = bm * c_pad * 4
    est = 2 * (weight_bytes + out_bytes) + (4 << 20)   # x2 pipeline buffers + headroom
    return int(min(max(est, 8 << 20), 64 << 20))


def gru_classifier_forward_batched(token_ids, packed):
    """token_ids: int array (B, S), values in [0, vocab). Returns (B, num_classes) f32 logits."""
    B, S = token_ids.shape
    _, num_classes, E, H, C = packed["dims"]
    V = packed["emb"].shape[0]

    BM = 8                                             # sequences per grid step (one sublane tile)
    B_pad = _round_up(B, BM)
    # Pad ids with zeros (valid vocab index) so padded tile rows stay in-bounds.
    ids = jnp.zeros((B_pad, S), jnp.int32).at[:B].set(token_ids.astype(jnp.int32))

    kernel = functools.partial(
        _gru_cls_kernel, bm=BM, seq_len=S, emb_pad=E, hidden_pad=H,
        inv_seq_len=1.0 / float(S))

    grid_spec = pltpu.PrefetchScalarGridSpec(
        num_scalar_prefetch=1,                         # token ids -> SMEM
        grid=(B_pad // BM,),                           # batch tiles only: no per-token grid
        in_specs=[
            # Whole padded embedding table, VMEM-resident (constant block index, one DMA).
            pl.BlockSpec((V, E), lambda i, ids: (0, 0)),
            # Weights / biases: constant block index -> DMA'd once, stay resident.
            pl.BlockSpec((E, 3 * H), lambda i, ids: (0, 0)),
            pl.BlockSpec((1, 3 * H), lambda i, ids: (0, 0)),
            pl.BlockSpec((1, H),     lambda i, ids: (0, 0)),
            pl.BlockSpec((H, C),     lambda i, ids: (0, 0)),
            pl.BlockSpec((1, C),     lambda i, ids: (0, 0)),
        ],
        out_specs=pl.BlockSpec((BM, C), lambda i, ids: (i, 0)),
    )

    out_pad = pl.pallas_call(
        kernel,
        out_shape=jax.ShapeDtypeStruct((B_pad, C), jnp.float32),
        grid_spec=grid_spec,
        compiler_params=pltpu.CompilerParams(
            dimension_semantics=("parallel",),         # batch tiles are independent (megacore)
            vmem_limit_bytes=_vmem_limit_bytes(packed, BM, C),
        ),
    )(ids, packed["emb"], packed["w_i3"], packed["b_i3"], packed["b_hn"],
      packed["fc_w"], packed["fc_b"])

    return out_pad[:B, :num_classes]                   # strip batch + lane padding outside


def gru_classifier_forward(token_ids, packed):
    """Module-equivalent forward: token_ids (S,) -> (1, num_classes), like the PyTorch module."""
    return gru_classifier_forward_batched(token_ids[None, :], packed)


def _reference_forward(token_ids, packed):
    """Pure-JAX reference using the same packed (bf16) weights, for a numerics check."""
    _, num_classes, E, H, C = packed["dims"]
    x = jnp.mean(packed["emb"][token_ids.astype(jnp.int32)], axis=0, keepdims=True)  # (1, E)
    gates = jnp.dot(x.astype(jnp.bfloat16), packed["w_i3"],
                    preferred_element_type=jnp.float32) + packed["b_i3"]
    r = jax.nn.sigmoid(gates[:, 0:H])
    z = jax.nn.sigmoid(gates[:, H:2 * H])
    n = jnp.tanh(gates[:, 2 * H:3 * H] + r * packed["b_hn"])
    h = (1.0 - z) * n
    out = jnp.dot(h.astype(jnp.bfloat16), packed["fc_w"],
                  preferred_element_type=jnp.float32) + packed["fc_b"]
    return out[:, :num_classes]


def init_params(key, vocab_size, emb_dim, hidden_dim, num_classes):
    ks = jax.random.split(key, 7)
    s = float(hidden_dim) ** -0.5
    return {
        "emb":  jax.random.normal(ks[0], (vocab_size, emb_dim), jnp.float32),
        "w_ih": jax.random.uniform(ks[1], (3 * hidden_dim, emb_dim), jnp.float32, -s, s),
        "w_hh": jax.random.uniform(ks[2], (3 * hidden_dim, hidden_dim), jnp.float32, -s, s),
        "b_ih": jax.random.uniform(ks[3], (3 * hidden_dim,), jnp.float32, -s, s),
        "b_hh": jax.random.uniform(ks[4], (3 * hidden_dim,), jnp.float32, -s, s),
        "fc_w": jax.random.uniform(ks[5], (num_classes, hidden_dim), jnp.float32, -s, s),
        "fc_b": jax.random.uniform(ks[6], (num_classes,), jnp.float32, -s, s),
    }


if __name__ == "__main__":
    vocab_size, emb_dim, hidden_dim, num_classes, seq_len = 32, 6, 6, 4, 8

    key = jax.random.PRNGKey(0)
    pkey, dkey, bkey = jax.random.split(key, 3)
    params = init_params(pkey, vocab_size, emb_dim, hidden_dim, num_classes)
    packed = pack_params(params)                       # one-time weight packing

    # Module-equivalent single-sequence forward (PyTorch: inputs -> (1, num_classes)).
    token_ids = jax.random.randint(dkey, (seq_len,), 0, vocab_size, dtype=jnp.int32)
    out = jax.block_until_ready(gru_classifier_forward(token_ids, packed))
    assert out.shape == (1, num_classes), out.shape
    assert out.dtype == jnp.float32

    ref = _reference_forward(token_ids, packed)
    assert jnp.allclose(out, ref, rtol=1e-3, atol=1e-3), (out, ref)

    # Batched throughput path: one kernel call, batch tiles on the parallel grid axis.
    batch_ids = jax.random.randint(bkey, (4, seq_len), 0, vocab_size, dtype=jnp.int32)
    out_b = jax.block_until_ready(gru_classifier_forward_batched(batch_ids, packed))
    assert out_b.shape == (4, num_classes), out_b.shape
    assert jnp.allclose(out_b[0:1], _reference_forward(batch_ids[0], packed),
                        rtol=1e-3, atol=1e-3)

    print("KERNEL_OK")
</pallas_src>

<mosaic_0001>
module attributes {stable_mosaic.version = 11 : i64} {
  func.func @_gru_cls_kernel(%arg0: i32, %arg1: memref<8x8xi32, #tpu.memory_space<smem>>, %arg2: memref<32x128xf32, #tpu.memory_space<vmem>>, %arg3: memref<128x384xbf16, #tpu.memory_space<vmem>>, %arg4: memref<1x384xf32, #tpu.memory_space<vmem>>, %arg5: memref<1x128xf32, #tpu.memory_space<vmem>>, %arg6: memref<128x128xbf16, #tpu.memory_space<vmem>>, %arg7: memref<1x128xf32, #tpu.memory_space<vmem>>, %arg8: memref<8x128xf32, #tpu.memory_space<vmem>>) attributes {dimension_semantics = [#tpu.dimension_semantics<parallel>], iteration_bounds = array<i64: 1>, scalar_prefetch = 1 : i64, scratch_operands = 0 : i64, tpu.core_type = #tpu.core_type<tc>, window_params = [{pipeline_mode = #tpu.pipeline_mode<synchronous>, transform_indices = @transform_0, window_bounds = array<i64: 32, 128>}, {pipeline_mode = #tpu.pipeline_mode<synchronous>, transform_indices = @transform_1, window_bounds = array<i64: 128, 384>}, {pipeline_mode = #tpu.pipeline_mode<synchronous>, transform_indices = @transform_2, window_bounds = array<i64: 1, 384>}, {pipeline_mode = #tpu.pipeline_mode<synchronous>, transform_indices = @transform_3, window_bounds = array<i64: 1, 128>}, {pipeline_mode = #tpu.pipeline_mode<synchronous>, transform_indices = @transform_4, window_bounds = array<i64: 128, 128>}, {pipeline_mode = #tpu.pipeline_mode<synchronous>, transform_indices = @transform_5, window_bounds = array<i64: 1, 128>}, {transform_indices = @transform_6, window_bounds = array<i64: 8, 128>}]} {
    %c8_i32 = arith.constant 8 : i32
    %0 = arith.muli %arg0, %c8_i32 : i32
    %c0_i32 = arith.constant 0 : i32
    %1 = arith.addi %0, %c0_i32 : i32
    %cst = arith.constant 0.000000e+00 : f32
    %2 = vector.broadcast %cst : f32 to vector<1x128xf32>
    %c0_i32_0 = arith.constant 0 : i32
    %3 = arith.index_cast %1 : i32 to index
    %4 = arith.index_cast %c0_i32_0 : i32 to index
    %5 = memref.load %arg1[%3, %4] : memref<8x8xi32, #tpu.memory_space<smem>>
    %6 = arith.index_cast %5 : i32 to index
    %c0 = arith.constant 0 : index
    %7 = vector.load %arg2[%6, %c0] : memref<32x128xf32, #tpu.memory_space<vmem>>, vector<1x128xf32>
    %8 = arith.addf %2, %7 : vector<1x128xf32>
    %c1_i32 = arith.constant 1 : i32
    %9 = arith.index_cast %1 : i32 to index
    %10 = arith.index_cast %c1_i32 : i32 to index
    %11 = memref.load %arg1[%9, %10] : memref<8x8xi32, #tpu.memory_space<smem>>
    %12 = arith.index_cast %11 : i32 to index
    %c0_1 = arith.constant 0 : index
    %13 = vector.load %arg2[%12, %c0_1] : memref<32x128xf32, #tpu.memory_space<vmem>>, vector<1x128xf32>
    %14 = arith.addf %8, %13 : vector<1x128xf32>
    %c2_i32 = arith.constant 2 : i32
    %15 = arith.index_cast %1 : i32 to index
    %16 = arith.index_cast %c2_i32 : i32 to index
    %17 = memref.load %arg1[%15, %16] : memref<8x8xi32, #tpu.memory_space<smem>>
    %18 = arith.index_cast %17 : i32 to index
    %c0_2 = arith.constant 0 : index
    %19 = vector.load %arg2[%18, %c0_2] : memref<32x128xf32, #tpu.memory_space<vmem>>, vector<1x128xf32>
    %20 = arith.addf %14, %19 : vector<1x128xf32>
    %c3_i32 = arith.constant 3 : i32
    %21 = arith.index_cast %1 : i32 to index
    %22 = arith.index_cast %c3_i32 : i32 to index
    %23 = memref.load %arg1[%21, %22] : memref<8x8xi32, #tpu.memory_space<smem>>
    %24 = arith.index_cast %23 : i32 to index
    %c0_3 = arith.constant 0 : index
    %25 = vector.load %arg2[%24, %c0_3] : memref<32x128xf32, #tpu.memory_space<vmem>>, vector<1x128xf32>
    %26 = arith.addf %20, %25 : vector<1x128xf32>
    %c4_i32 = arith.constant 4 : i32
    %27 = arith.index_cast %1 : i32 to index
    %28 = arith.index_cast %c4_i32 : i32 to index
    %29 = memref.load %arg1[%27, %28] : memref<8x8xi32, #tpu.memory_space<smem>>
    %30 = arith.index_cast %29 : i32 to index
    %c0_4 = arith.constant 0 : index
    %31 = vector.load %arg2[%30, %c0_4] : memref<32x128xf32, #tpu.memory_space<vmem>>, vector<1x128xf32>
    %32 = arith.addf %26, %31 : vector<1x128xf32>
    %c5_i32 = arith.constant 5 : i32
    %33 = arith.index_cast %1 : i32 to index
    %34 = arith.index_cast %c5_i32 : i32 to index
    %35 = memref.load %arg1[%33, %34] : memref<8x8xi32, #tpu.memory_space<smem>>
    %36 = arith.index_cast %35 : i32 to index
    %c0_5 = arith.constant 0 : index
    %37 = vector.load %arg2[%36, %c0_5] : memref<32x128xf32, #tpu.memory_space<vmem>>, vector<1x128xf32>
    %38 = arith.addf %32, %37 : vector<1x128xf32>
    %c6_i32 = arith.constant 6 : i32
    %39 = arith.index_cast %1 : i32 to index
    %40 = arith.index_cast %c6_i32 : i32 to index
    %41 = memref.load %arg1[%39, %40] : memref<8x8xi32, #tpu.memory_space<smem>>
    %42 = arith.index_cast %41 : i32 to index
    %c0_6 = arith.constant 0 : index
    %43 = vector.load %arg2[%42, %c0_6] : memref<32x128xf32, #tpu.memory_space<vmem>>, vector<1x128xf32>
    %44 = arith.addf %38, %43 : vector<1x128xf32>
    %c7_i32 = arith.constant 7 : i32
    %45 = arith.index_cast %1 : i32 to index
    %46 = arith.index_cast %c7_i32 : i32 to index
    %47 = memref.load %arg1[%45, %46] : memref<8x8xi32, #tpu.memory_space<smem>>
    %48 = arith.index_cast %47 : i32 to index
    %c0_7 = arith.constant 0 : index
    %49 = vector.load %arg2[%48, %c0_7] : memref<32x128xf32, #tpu.memory_space<vmem>>, vector<1x128xf32>
    %50 = arith.addf %44, %49 : vector<1x128xf32>
    %c8_i32_8 = arith.constant 8 : i32
    %c8_i32_9 = arith.constant 8 : i32
    %51 = arith.muli %arg0, %c8_i32_9 : i32
    %c1_i32_10 = arith.constant 1 : i32
    %52 = arith.addi %51, %c1_i32_10 : i32
    %cst_11 = arith.constant 0.000000e+00 : f32
    %53 = vector.broadcast %cst_11 : f32 to vector<1x128xf32>
    %c0_i32_12 = arith.constant 0 : i32
    %54 = arith.index_cast %52 : i32 to index
    %55 = arith.index_cast %c0_i32_12 : i32 to index
    %56 = memref.load %arg1[%54, %55] : memref<8x8xi32, #tpu.memory_space<smem>>
    %57 = arith.index_cast %56 : i32 to index
    %c0_13 = arith.constant 0 : index
    %58 = vector.load %arg2[%57, %c0_13] : memref<32x128xf32, #tpu.memory_space<vmem>>, vector<1x128xf32>
    %59 = arith.addf %53, %58 : vector<1x128xf32>
    %c1_i32_14 = arith.constant 1 : i32
    %60 = arith.index_cast %52 : i32 to index
    %61 = arith.index_cast %c1_i32_14 : i32 to index
    %62 = memref.load %arg1[%60, %61] : memref<8x8xi32, #tpu.memory_space<smem>>
    %63 = arith.index_cast %62 : i32 to index
    %c0_15 = arith.constant 0 : index
    %64 = vector.load %arg2[%63, %c0_15] : memref<32x128xf32, #tpu.memory_space<vmem>>, vector<1x128xf32>
    %65 = arith.addf %59, %64 : vector<1x128xf32>
    %c2_i32_16 = arith.constant 2 : i32
    %66 = arith.index_cast %52 : i32 to index
    %67 = arith.index_cast %c2_i32_16 : i32 to index
    %68 = memref.load %arg1[%66, %67] : memref<8x8xi32, #tpu.memory_space<smem>>
    %69 = arith.index_cast %68 : i32 to index
    %c0_17 = arith.constant 0 : index
    %70 = vector.load %arg2[%69, %c0_17] : memref<32x128xf32, #tpu.memory_space<vmem>>, vector<1x128xf32>
    %71 = arith.addf %65, %70 : vector<1x128xf32>
    %c3_i32_18 = arith.constant 3 : i32
    %72 = arith.index_cast %52 : i32 to index
    %73 = arith.index_cast %c3_i32_18 : i32 to index
    %74 = memref.load %arg1[%72, %73] : memref<8x8xi32, #tpu.memory_space<smem>>
    %75 = arith.index_cast %74 : i32 to index
    %c0_19 = arith.constant 0 : index
    %76 = vector.load %arg2[%75, %c0_19] : memref<32x128xf32, #tpu.memory_space<vmem>>, vector<1x128xf32>
    %77 = arith.addf %71, %76 : vector<1x128xf32>
    %c4_i32_20 = arith.constant 4 : i32
    %78 = arith.index_cast %52 : i32 to index
    %79 = arith.index_cast %c4_i32_20 : i32 to index
    %80 = memref.load %arg1[%78, %79] : memref<8x8xi32, #tpu.memory_space<smem>>
    %81 = arith.index_cast %80 : i32 to index
    %c0_21 = arith.constant 0 : index
    %82 = vector.load %arg2[%81, %c0_21] : memref<32x128xf32, #tpu.memory_space<vmem>>, vector<1x128xf32>
    %83 = arith.addf %77, %82 : vector<1x128xf32>
    %c5_i32_22 = arith.constant 5 : i32
    %84 = arith.index_cast %52 : i32 to index
    %85 = arith.index_cast %c5_i32_22 : i32 to index
    %86 = memref.load %arg1[%84, %85] : memref<8x8xi32, #tpu.memory_space<smem>>
    %87 = arith.index_cast %86 : i32 to index
    %c0_23 = arith.constant 0 : index
    %88 = vector.load %arg2[%87, %c0_23] : memref<32x128xf32, #tpu.memory_space<vmem>>, vector<1x128xf32>
    %89 = arith.addf %83, %88 : vector<1x128xf32>
    %c6_i32_24 = arith.constant 6 : i32
    %90 = arith.index_cast %52 : i32 to index
    %91 = arith.index_cast %c6_i32_24 : i32 to index
    %92 = memref.load %arg1[%90, %91] : memref<8x8xi32, #tpu.memory_space<smem>>
    %93 = arith.index_cast %92 : i32 to index
    %c0_25 = arith.constant 0 : index
    %94 = vector.load %arg2[%93, %c0_25] : memref<32x128xf32, #tpu.memory_space<vmem>>, vector<1x128xf32>
    %95 = arith.addf %89, %94 : vector<1x128xf32>
    %c7_i32_26 = arith.constant 7 : i32
    %96 = arith.index_cast %52 : i32 to index
    %97 = arith.index_cast %c7_i32_26 : i32 to index
    %98 = memref.load %arg1[%96, %97] : memref<8x8xi32, #tpu.memory_space<smem>>
    %99 = arith.index_cast %98 : i32 to index
    %c0_27 = arith.constant 0 : index
    %100 = vector.load %arg2[%99, %c0_27] : memref<32x128xf32, #tpu.memory_space<vmem>>, vector<1x128xf32>
    %101 = arith.addf %95, %100 : vector<1x128xf32>
    %c8_i32_28 = arith.constant 8 : i32
    %c8_i32_29 = arith.constant 8 : i32
    %102 = arith.muli %arg0, %c8_i32_29 : i32
    %c2_i32_30 = arith.constant 2 : i32
    %103 = arith.addi %102, %c2_i32_30 : i32
    %cst_31 = arith.constant 0.000000e+00 : f32
    %104 = vector.broadcast %cst_31 : f32 to vector<1x128xf32>
    %c0_i32_32 = arith.constant 0 : i32
    %105 = arith.index_cast %103 : i32 to index
    %106 = arith.index_cast %c0_i32_32 : i32 to index
    %107 = memref.load %arg1[%105, %106] : memref<8x8xi32, #tpu.memory_space<smem>>
    %108 = arith.index_cast %107 : i32 to index
    %c0_33 = arith.constant 0 : index
    %109 = vector.load %arg2[%108, %c0_33] : memref<32x128xf32, #tpu.memory_space<vmem>>, vector<1x128xf32>
    %110 = arith.addf %104, %109 : vector<1x128xf32>
    %c1_i32_34 = arith.constant 1 : i32
    %111 = arith.index_cast %103 : i32 to index
    %112 = arith.index_cast %c1_i32_34 : i32 to index
    %113 = memref.load %arg1[%111, %112] : memref<8x8xi32, #tpu.memory_space<smem>>
    %114 = arith.index_cast %113 : i32 to index
    %c0_35 = arith.constant 0 : index
    %115 = vector.load %arg2[%114, %c0_35] : memref<32x128xf32, #tpu.memory_space<vmem>>, vector<1x128xf32>
    %116 = arith.addf %110, %115 : vector<1x128xf32>
    %c2_i32_36 = arith.constant 2 : i32
    %117 = arith.index_cast %103 : i32 to index
    %118 = arith.index_cast %c2_i32_36 : i32 to index
    %119 = memref.load %arg1[%117, %118] : memref<8x8xi32, #tpu.memory_space<smem>>
    %120 = arith.index_cast %119 : i32 to index
    %c0_37 = arith.constant 0 : index
    %121 = vector.load %arg2[%120, %c0_37] : memref<32x128xf32, #tpu.memory_space<vmem>>, vector<1x128xf32>
    %122 = arith.addf %116, %121 : vector<1x128xf32>
    %c3_i32_38 = arith.constant 3 : i32
    %123 = arith.index_cast %103 : i32 to index
    %124 = arith.index_cast %c3_i32_38 : i32 to index
    %125 = memref.load %arg1[%123, %124] : memref<8x8xi32, #tpu.memory_space<smem>>
    %126 = arith.index_cast %125 : i32 to index
    %c0_39 = arith.constant 0 : index
    %127 = vector.load %arg2[%126, %c0_39] : memref<32x128xf32, #tpu.memory_space<vmem>>, vector<1x128xf32>
    %128 = arith.addf %122, %127 : vector<1x128xf32>
    %c4_i32_40 = arith.constant 4 : i32
    %129 = arith.index_cast %103 : i32 to index
    %130 = arith.index_cast %c4_i32_40 : i32 to index
    %131 = memref.load %arg1[%129, %130] : memref<8x8xi32, #tpu.memory_space<smem>>
    %132 = arith.index_cast %131 : i32 to index
    %c0_41 = arith.constant 0 : index
    %133 = vector.load %arg2[%132, %c0_41] : memref<32x128xf32, #tpu.memory_space<vmem>>, vector<1x128xf32>
    %134 = arith.addf %128, %133 : vector<1x128xf32>
    %c5_i32_42 = arith.constant 5 : i32
    %135 = arith.index_cast %103 : i32 to index
    %136 = arith.index_cast %c5_i32_42 : i32 to index
    %137 = memref.load %arg1[%135, %136] : memref<8x8xi32, #tpu.memory_space<smem>>
    %138 = arith.index_cast %137 : i32 to index
    %c0_43 = arith.constant 0 : index
    %139 = vector.load %arg2[%138, %c0_43] : memref<32x128xf32, #tpu.memory_space<vmem>>, vector<1x128xf32>
    %140 = arith.addf %134, %139 : vector<1x128xf32>
    %c6_i32_44 = arith.constant 6 : i32
    %141 = arith.index_cast %103 : i32 to index
    %142 = arith.index_cast %c6_i32_44 : i32 to index
    %143 = memref.load %arg1[%141, %142] : memref<8x8xi32, #tpu.memory_space<smem>>
    %144 = arith.index_cast %143 : i32 to index
    %c0_45 = arith.constant 0 : index
    %145 = vector.load %arg2[%144, %c0_45] : memref<32x128xf32, #tpu.memory_space<vmem>>, vector<1x128xf32>
    %146 = arith.addf %140, %145 : vector<1x128xf32>
    %c7_i32_46 = arith.constant 7 : i32
    %147 = arith.index_cast %103 : i32 to index
    %148 = arith.index_cast %c7_i32_46 : i32 to index
    %149 = memref.load %arg1[%147, %148] : memref<8x8xi32, #tpu.memory_space<smem>>
    %150 = arith.index_cast %149 : i32 to index
    %c0_47 = arith.constant 0 : index
    %151 = vector.load %arg2[%150, %c0_47] : memref<32x128xf32, #tpu.memory_space<vmem>>, vector<1x128xf32>
    %152 = arith.addf %146, %151 : vector<1x128xf32>
    %c8_i32_48 = arith.constant 8 : i32
    %c8_i32_49 = arith.constant 8 : i32
    %153 = arith.muli %arg0, %c8_i32_49 : i32
    %c3_i32_50 = arith.constant 3 : i32
    %154 = arith.addi %153, %c3_i32_50 : i32
    %cst_51 = arith.constant 0.000000e+00 : f32
    %155 = vector.broadcast %cst_51 : f32 to vector<1x128xf32>
    %c0_i32_52 = arith.constant 0 : i32
    %156 = arith.index_cast %154 : i32 to index
    %157 = arith.index_cast %c0_i32_52 : i32 to index
    %158 = memref.load %arg1[%156, %157] : memref<8x8xi32, #tpu.memory_space<smem>>
    %159 = arith.index_cast %158 : i32 to index
    %c0_53 = arith.constant 0 : index
    %160 = vector.load %arg2[%159, %c0_53] : memref<32x128xf32, #tpu.memory_space<vmem>>, vector<1x128xf32>
    %161 = arith.addf %155, %160 : vector<1x128xf32>
    %c1_i32_54 = arith.constant 1 : i32
    %162 = arith.index_cast %154 : i32 to index
    %163 = arith.index_cast %c1_i32_54 : i32 to index
    %164 = memref.load %arg1[%162, %163] : memref<8x8xi32, #tpu.memory_space<smem>>
    %165 = arith.index_cast %164 : i32 to index
    %c0_55 = arith.constant 0 : index
    %166 = vector.load %arg2[%165, %c0_55] : memref<32x128xf32, #tpu.memory_space<vmem>>, vector<1x128xf32>
    %167 = arith.addf %161, %166 : vector<1x128xf32>
    %c2_i32_56 = arith.constant 2 : i32
    %168 = arith.index_cast %154 : i32 to index
    %169 = arith.index_cast %c2_i32_56 : i32 to index
    %170 = memref.load %arg1[%168, %169] : memref<8x8xi32, #tpu.memory_space<smem>>
    %171 = arith.index_cast %170 : i32 to index
    %c0_57 = arith.constant 0 : index
    %172 = vector.load %arg2[%171, %c0_57] : memref<32x128xf32, #tpu.memory_space<vmem>>, vector<1x128xf32>
    %173 = arith.addf %167, %172 : vector<1x128xf32>
    %c3_i32_58 = arith.constant 3 : i32
    %174 = arith.index_cast %154 : i32 to index
    %175 = arith.index_cast %c3_i32_58 : i32 to index
    %176 = memref.load %arg1[%174, %175] : memref<8x8xi32, #tpu.memory_space<smem>>
    %177 = arith.index_cast %176 : i32 to index
    %c0_59 = arith.constant 0 : index
    %178 = vector.load %arg2[%177, %c0_59] : memref<32x128xf32, #tpu.memory_space<vmem>>, vector<1x128xf32>
    %179 = arith.addf %173, %178 : vector<1x128xf32>
    %c4_i32_60 = arith.constant 4 : i32
    %180 = arith.index_cast %154 : i32 to index
    %181 = arith.index_cast %c4_i32_60 : i32 to index
    %182 = memref.load %arg1[%180, %181] : memref<8x8xi32, #tpu.memory_space<smem>>
    %183 = arith.index_cast %182 : i32 to index
    %c0_61 = arith.constant 0 : index
    %184 = vector.load %arg2[%183, %c0_61] : memref<32x128xf32, #tpu.memory_space<vmem>>, vector<1x128xf32>
    %185 = arith.addf %179, %184 : vector<1x128xf32>
    %c5_i32_62 = arith.constant 5 : i32
    %186 = arith.index_cast %154 : i32 to index
    %187 = arith.index_cast %c5_i32_62 : i32 to index
    %188 = memref.load %arg1[%186, %187] : memref<8x8xi32, #tpu.memory_space<smem>>
    %189 = arith.index_cast %188 : i32 to index
    %c0_63 = arith.constant 0 : index
    %190 = vector.load %arg2[%189, %c0_63] : memref<32x128xf32, #tpu.memory_space<vmem>>, vector<1x128xf32>
    %191 = arith.addf %185, %190 : vector<1x128xf32>
    %c6_i32_64 = arith.constant 6 : i32
    %192 = arith.index_cast %154 : i32 to index
    %193 = arith.index_cast %c6_i32_64 : i32 to index
    %194 = memref.load %arg1[%192, %193] : memref<8x8xi32, #tpu.memory_space<smem>>
    %195 = arith.index_cast %194 : i32 to index
    %c0_65 = arith.constant 0 : index
    %196 = vector.load %arg2[%195, %c0_65] : memref<32x128xf32, #tpu.memory_space<vmem>>, vector<1x128xf32>
    %197 = arith.addf %191, %196 : vector<1x128xf32>
    %c7_i32_66 = arith.constant 7 : i32
    %198 = arith.index_cast %154 : i32 to index
    %199 = arith.index_cast %c7_i32_66 : i32 to index
    %200 = memref.load %arg1[%198, %199] : memref<8x8xi32, #tpu.memory_space<smem>>
    %201 = arith.index_cast %200 : i32 to index
    %c0_67 = arith.constant 0 : index
    %202 = vector.load %arg2[%201, %c0_67] : memref<32x128xf32, #tpu.memory_space<vmem>>, vector<1x128xf32>
    %203 = arith.addf %197, %202 : vector<1x128xf32>
    %c8_i32_68 = arith.constant 8 : i32
    %c8_i32_69 = arith.constant 8 : i32
    %204 = arith.muli %arg0, %c8_i32_69 : i32
    %c4_i32_70 = arith.constant 4 : i32
    %205 = arith.addi %204, %c4_i32_70 : i32
    %cst_71 = arith.constant 0.000000e+00 : f32
    %206 = vector.broadcast %cst_71 : f32 to vector<1x128xf32>
    %c0_i32_72 = arith.constant 0 : i32
    %207 = arith.index_cast %205 : i32 to index
    %208 = arith.index_cast %c0_i32_72 : i32 to index
    %209 = memref.load %arg1[%207, %208] : memref<8x8xi32, #tpu.memory_space<smem>>
    %210 = arith.index_cast %209 : i32 to index
    %c0_73 = arith.constant 0 : index
    %211 = vector.load %arg2[%210, %c0_73] : memref<32x128xf32, #tpu.memory_space<vmem>>, vector<1x128xf32>
    %212 = arith.addf %206, %211 : vector<1x128xf32>
    %c1_i32_74 = arith.constant 1 : i32
    %213 = arith.index_cast %205 : i32 to index
    %214 = arith.index_cast %c1_i32_74 : i32 to index
    %215 = memref.load %arg1[%213, %214] : memref<8x8xi32, #tpu.memory_space<smem>>
    %216 = arith.index_cast %215 : i32 to index
    %c0_75 = arith.constant 0 : index
    %217 = vector.load %arg2[%216, %c0_75] : memref<32x128xf32, #tpu.memory_space<vmem>>, vector<1x128xf32>
    %218 = arith.addf %212, %217 : vector<1x128xf32>
    %c2_i32_76 = arith.constant 2 : i32
    %219 = arith.index_cast %205 : i32 to index
    %220 = arith.index_cast %c2_i32_76 : i32 to index
    %221 = memref.load %arg1[%219, %220] : memref<8x8xi32, #tpu.memory_space<smem>>
    %222 = arith.index_cast %221 : i32 to index
    %c0_77 = arith.constant 0 : index
    %223 = vector.load %arg2[%222, %c0_77] : memref<32x128xf32, #tpu.memory_space<vmem>>, vector<1x128xf32>
    %224 = arith.addf %218, %223 : vector<1x128xf32>
    %c3_i32_78 = arith.constant 3 : i32
    %225 = arith.index_cast %205 : i32 to index
    %226 = arith.index_cast %c3_i32_78 : i32 to index
    %227 = memref.load %arg1[%225, %226] : memref<8x8xi32, #tpu.memory_space<smem>>
    %228 = arith.index_cast %227 : i32 to index
    %c0_79 = arith.constant 0 : index
    %229 = vector.load %arg2[%228, %c0_79] : memref<32x128xf32, #tpu.memory_space<vmem>>, vector<1x128xf32>
    %230 = arith.addf %224, %229 : vector<1x128xf32>
    %c4_i32_80 = arith.constant 4 : i32
    %231 = arith.index_cast %205 : i32 to index
    %232 = arith.index_cast %c4_i32_80 : i32 to index
    %233 = memref.load %arg1[%231, %232] : memref<8x8xi32, #tpu.memory_space<smem>>
    %234 = arith.index_cast %233 : i32 to index
    %c0_81 = arith.constant 0 : index
    %235 = vector.load %arg2[%234, %c0_81] : memref<32x128xf32, #tpu.memory_space<vmem>>, vector<1x128xf32>
    %236 = arith.addf %230, %235 : vector<1x128xf32>
    %c5_i32_82 = arith.constant 5 : i32
    %237 = arith.index_cast %205 : i32 to index
    %238 = arith.index_cast %c5_i32_82 : i32 to index
    %239 = memref.load %arg1[%237, %238] : memref<8x8xi32, #tpu.memory_space<smem>>
    %240 = arith.index_cast %239 : i32 to index
    %c0_83 = arith.constant 0 : index
    %241 = vector.load %arg2[%240, %c0_83] : memref<32x128xf32, #tpu.memory_space<vmem>>, vector<1x128xf32>
    %242 = arith.addf %236, %241 : vector<1x128xf32>
    %c6_i32_84 = arith.constant 6 : i32
    %243 = arith.index_cast %205 : i32 to index
    %244 = arith.index_cast %c6_i32_84 : i32 to index
    %245 = memref.load %arg1[%243, %244] : memref<8x8xi32, #tpu.memory_space<smem>>
    %246 = arith.index_cast %245 : i32 to index
    %c0_85 = arith.constant 0 : index
    %247 = vector.load %arg2[%246, %c0_85] : memref<32x128xf32, #tpu.memory_space<vmem>>, vector<1x128xf32>
    %248 = arith.addf %242, %247 : vector<1x128xf32>
    %c7_i32_86 = arith.constant 7 : i32
    %249 = arith.index_cast %205 : i32 to index
    %250 = arith.index_cast %c7_i32_86 : i32 to index
    %251 = memref.load %arg1[%249, %250] : memref<8x8xi32, #tpu.memory_space<smem>>
    %252 = arith.index_cast %251 : i32 to index
    %c0_87 = arith.constant 0 : index
    %253 = vector.load %arg2[%252, %c0_87] : memref<32x128xf32, #tpu.memory_space<vmem>>, vector<1x128xf32>
    %254 = arith.addf %248, %253 : vector<1x128xf32>
    %c8_i32_88 = arith.constant 8 : i32
    %c8_i32_89 = arith.constant 8 : i32
    %255 = arith.muli %arg0, %c8_i32_89 : i32
    %c5_i32_90 = arith.constant 5 : i32
    %256 = arith.addi %255, %c5_i32_90 : i32
    %cst_91 = arith.constant 0.000000e+00 : f32
    %257 = vector.broadcast %cst_91 : f32 to vector<1x128xf32>
    %c0_i32_92 = arith.constant 0 : i32
    %258 = arith.index_cast %256 : i32 to index
    %259 = arith.index_cast %c0_i32_92 : i32 to index
    %260 = memref.load %arg1[%258, %259] : memref<8x8xi32, #tpu.memory_space<smem>>
    %261 = arith.index_cast %260 : i32 to index
    %c0_93 = arith.constant 0 : index
    %262 = vector.load %arg2[%261, %c0_93] : memref<32x128xf32, #tpu.memory_space<vmem>>, vector<1x128xf32>
    %263 = arith.addf %257, %262 : vector<1x128xf32>
    %c1_i32_94 = arith.constant 1 : i32
    %264 = arith.index_cast %256 : i32 to index
    %265 = arith.index_cast %c1_i32_94 : i32 to index
    %266 = memref.load %arg1[%264, %265] : memref<8x8xi32, #tpu.memory_space<smem>>
    %267 = arith.index_cast %266 : i32 to index
    %c0_95 = arith.constant 0 : index
    %268 = vector.load %arg2[%267, %c0_95] : memref<32x128xf32, #tpu.memory_space<vmem>>, vector<1x128xf32>
    %269 = arith.addf %263, %268 : vector<1x128xf32>
    %c2_i32_96 = arith.constant 2 : i32
    %270 = arith.index_cast %256 : i32 to index
    %271 = arith.index_cast %c2_i32_96 : i32 to index
    %272 = memref.load %arg1[%270, %271] : memref<8x8xi32, #tpu.memory_space<smem>>
    %273 = arith.index_cast %272 : i32 to index
    %c0_97 = arith.constant 0 : index
    %274 = vector.load %arg2[%273, %c0_97] : memref<32x128xf32, #tpu.memory_space<vmem>>, vector<1x128xf32>
    %275 = arith.addf %269, %274 : vector<1x128xf32>
    %c3_i32_98 = arith.constant 3 : i32
    %276 = arith.index_cast %256 : i32 to index
    %277 = arith.index_cast %c3_i32_98 : i32 to index
    %278 = memref.load %arg1[%276, %277] : memref<8x8xi32, #tpu.memory_space<smem>>
    %279 = arith.index_cast %278 : i32 to index
    %c0_99 = arith.constant 0 : index
    %280 = vector.load %arg2[%279, %c0_99] : memref<32x128xf32, #tpu.memory_space<vmem>>, vector<1x128xf32>
    %281 = arith.addf %275, %280 : vector<1x128xf32>
    %c4_i32_100 = arith.constant 4 : i32
    %282 = arith.index_cast %256 : i32 to index
    %283 = arith.index_cast %c4_i32_100 : i32 to index
    %284 = memref.load %arg1[%282, %283] : memref<8x8xi32, #tpu.memory_space<smem>>
    %285 = arith.index_cast %284 : i32 to index
    %c0_101 = arith.constant 0 : index
    %286 = vector.load %arg2[%285, %c0_101] : memref<32x128xf32, #tpu.memory_space<vmem>>, vector<1x128xf32>
    %287 = arith.addf %281, %286 : vector<1x128xf32>
    %c5_i32_102 = arith.constant 5 : i32
    %288 = arith.index_cast %256 : i32 to index
    %289 = arith.index_cast %c5_i32_102 : i32 to index
    %290 = memref.load %arg1[%288, %289] : memref<8x8xi32, #tpu.memory_space<smem>>
    %291 = arith.index_cast %290 : i32 to index
    %c0_103 = arith.constant 0 : index
    %292 = vector.load %arg2[%291, %c0_103] : memref<32x128xf32, #tpu.memory_space<vmem>>, vector<1x128xf32>
    %293 = arith.addf %287, %292 : vector<1x128xf32>
    %c6_i32_104 = arith.constant 6 : i32
    %294 = arith.index_cast %256 : i32 to index
    %295 = arith.index_cast %c6_i32_104 : i32 to index
    %296 = memref.load %arg1[%294, %295] : memref<8x8xi32, #tpu.memory_space<smem>>
    %297 = arith.index_cast %296 : i32 to index
    %c0_105 = arith.constant 0 : index
    %298 = vector.load %arg2[%297, %c0_105] : memref<32x128xf32, #tpu.memory_space<vmem>>, vector<1x128xf32>
    %299 = arith.addf %293, %298 : vector<1x128xf32>
    %c7_i32_106 = arith.constant 7 : i32
    %300 = arith.index_cast %256 : i32 to index
    %301 = arith.index_cast %c7_i32_106 : i32 to index
    %302 = memref.load %arg1[%300, %301] : memref<8x8xi32, #tpu.memory_space<smem>>
    %303 = arith.index_cast %302 : i32 to index
    %c0_107 = arith.constant 0 : index
    %304 = vector.load %arg2[%303, %c0_107] : memref<32x128xf32, #tpu.memory_space<vmem>>, vector<1x128xf32>
    %305 = arith.addf %299, %304 : vector<1x128xf32>
    %c8_i32_108 = arith.constant 8 : i32
    %c8_i32_109 = arith.constant 8 : i32
    %306 = arith.muli %arg0, %c8_i32_109 : i32
    %c6_i32_110 = arith.constant 6 : i32
    %307 = arith.addi %306, %c6_i32_110 : i32
    %cst_111 = arith.constant 0.000000e+00 : f32
    %308 = vector.broadcast %cst_111 : f32 to vector<1x128xf32>
    %c0_i32_112 = arith.constant 0 : i32
    %309 = arith.index_cast %307 : i32 to index
    %310 = arith.index_cast %c0_i32_112 : i32 to index
    %311 = memref.load %arg1[%309, %310] : memref<8x8xi32, #tpu.memory_space<smem>>
    %312 = arith.index_cast %311 : i32 to index
    %c0_113 = arith.constant 0 : index
    %313 = vector.load %arg2[%312, %c0_113] : memref<32x128xf32, #tpu.memory_space<vmem>>, vector<1x128xf32>
    %314 = arith.addf %308, %313 : vector<1x128xf32>
    %c1_i32_114 = arith.constant 1 : i32
    %315 = arith.index_cast %307 : i32 to index
    %316 = arith.index_cast %c1_i32_114 : i32 to index
    %317 = memref.load %arg1[%315, %316] : memref<8x8xi32, #tpu.memory_space<smem>>
    %318 = arith.index_cast %317 : i32 to index
    %c0_115 = arith.constant 0 : index
    %319 = vector.load %arg2[%318, %c0_115] : memref<32x128xf32, #tpu.memory_space<vmem>>, vector<1x128xf32>
    %320 = arith.addf %314, %319 : vector<1x128xf32>
    %c2_i32_116 = arith.constant 2 : i32
    %321 = arith.index_cast %307 : i32 to index
    %322 = arith.index_cast %c2_i32_116 : i32 to index
    %323 = memref.load %arg1[%321, %322] : memref<8x8xi32, #tpu.memory_space<smem>>
    %324 = arith.index_cast %323 : i32 to index
    %c0_117 = arith.constant 0 : index
    %325 = vector.load %arg2[%324, %c0_117] : memref<32x128xf32, #tpu.memory_space<vmem>>, vector<1x128xf32>
    %326 = arith.addf %320, %325 : vector<1x128xf32>
    %c3_i32_118 = arith.constant 3 : i32
    %327 = arith.index_cast %307 : i32 to index
    %328 = arith.index_cast %c3_i32_118 : i32 to index
    %329 = memref.load %arg1[%327, %328] : memref<8x8xi32, #tpu.memory_space<smem>>
    %330 = arith.index_cast %329 : i32 to index
    %c0_119 = arith.constant 0 : index
    %331 = vector.load %arg2[%330, %c0_119] : memref<32x128xf32, #tpu.memory_space<vmem>>, vector<1x128xf32>
    %332 = arith.addf %326, %331 : vector<1x128xf32>
    %c4_i32_120 = arith.constant 4 : i32
    %333 = arith.index_cast %307 : i32 to index
    %334 = arith.index_cast %c4_i32_120 : i32 to index
    %335 = memref.load %arg1[%333, %334] : memref<8x8xi32, #tpu.memory_space<smem>>
    %336 = arith.index_cast %335 : i32 to index
    %c0_121 = arith.constant 0 : index
    %337 = vector.load %arg2[%336, %c0_121] : memref<32x128xf32, #tpu.memory_space<vmem>>, vector<1x128xf32>
    %338 = arith.addf %332, %337 : vector<1x128xf32>
    %c5_i32_122 = arith.constant 5 : i32
    %339 = arith.index_cast %307 : i32 to index
    %340 = arith.index_cast %c5_i32_122 : i32 to index
    %341 = memref.load %arg1[%339, %340] : memref<8x8xi32, #tpu.memory_space<smem>>
    %342 = arith.index_cast %341 : i32 to index
    %c0_123 = arith.constant 0 : index
    %343 = vector.load %arg2[%342, %c0_123] : memref<32x128xf32, #tpu.memory_space<vmem>>, vector<1x128xf32>
    %344 = arith.addf %338, %343 : vector<1x128xf32>
    %c6_i32_124 = arith.constant 6 : i32
    %345 = arith.index_cast %307 : i32 to index
    %346 = arith.index_cast %c6_i32_124 : i32 to index
    %347 = memref.load %arg1[%345, %346] : memref<8x8xi32, #tpu.memory_space<smem>>
    %348 = arith.index_cast %347 : i32 to index
    %c0_125 = arith.constant 0 : index
    %349 = vector.load %arg2[%348, %c0_125] : memref<32x128xf32, #tpu.memory_space<vmem>>, vector<1x128xf32>
    %350 = arith.addf %344, %349 : vector<1x128xf32>
    %c7_i32_126 = arith.constant 7 : i32
    %351 = arith.index_cast %307 : i32 to index
    %352 = arith.index_cast %c7_i32_126 : i32 to index
    %353 = memref.load %arg1[%351, %352] : memref<8x8xi32, #tpu.memory_space<smem>>
    %354 = arith.index_cast %353 : i32 to index
    %c0_127 = arith.constant 0 : index
    %355 = vector.load %arg2[%354, %c0_127] : memref<32x128xf32, #tpu.memory_space<vmem>>, vector<1x128xf32>
    %356 = arith.addf %350, %355 : vector<1x128xf32>
    %c8_i32_128 = arith.constant 8 : i32
    %c8_i32_129 = arith.constant 8 : i32
    %357 = arith.muli %arg0, %c8_i32_129 : i32
    %c7_i32_130 = arith.constant 7 : i32
    %358 = arith.addi %357, %c7_i32_130 : i32
    %cst_131 = arith.constant 0.000000e+00 : f32
    %359 = vector.broadcast %cst_131 : f32 to vector<1x128xf32>
    %c0_i32_132 = arith.constant 0 : i32
    %360 = arith.index_cast %358 : i32 to index
    %361 = arith.index_cast %c0_i32_132 : i32 to index
    %362 = memref.load %arg1[%360, %361] : memref<8x8xi32, #tpu.memory_space<smem>>
    %363 = arith.index_cast %362 : i32 to index
    %c0_133 = arith.constant 0 : index
    %364 = vector.load %arg2[%363, %c0_133] : memref<32x128xf32, #tpu.memory_space<vmem>>, vector<1x128xf32>
    %365 = arith.addf %359, %364 : vector<1x128xf32>
    %c1_i32_134 = arith.constant 1 : i32
    %366 = arith.index_cast %358 : i32 to index
    %367 = arith.index_cast %c1_i32_134 : i32 to index
    %368 = memref.load %arg1[%366, %367] : memref<8x8xi32, #tpu.memory_space<smem>>
    %369 = arith.index_cast %368 : i32 to index
    %c0_135 = arith.constant 0 : index
    %370 = vector.load %arg2[%369, %c0_135] : memref<32x128xf32, #tpu.memory_space<vmem>>, vector<1x128xf32>
    %371 = arith.addf %365, %370 : vector<1x128xf32>
    %c2_i32_136 = arith.constant 2 : i32
    %372 = arith.index_cast %358 : i32 to index
    %373 = arith.index_cast %c2_i32_136 : i32 to index
    %374 = memref.load %arg1[%372, %373] : memref<8x8xi32, #tpu.memory_space<smem>>
    %375 = arith.index_cast %374 : i32 to index
    %c0_137 = arith.constant 0 : index
    %376 = vector.load %arg2[%375, %c0_137] : memref<32x128xf32, #tpu.memory_space<vmem>>, vector<1x128xf32>
    %377 = arith.addf %371, %376 : vector<1x128xf32>
    %c3_i32_138 = arith.constant 3 : i32
    %378 = arith.index_cast %358 : i32 to index
    %379 = arith.index_cast %c3_i32_138 : i32 to index
    %380 = memref.load %arg1[%378, %379] : memref<8x8xi32, #tpu.memory_space<smem>>
    %381 = arith.index_cast %380 : i32 to index
    %c0_139 = arith.constant 0 : index
    %382 = vector.load %arg2[%381, %c0_139] : memref<32x128xf32, #tpu.memory_space<vmem>>, vector<1x128xf32>
    %383 = arith.addf %377, %382 : vector<1x128xf32>
    %c4_i32_140 = arith.constant 4 : i32
    %384 = arith.index_cast %358 : i32 to index
    %385 = arith.index_cast %c4_i32_140 : i32 to index
    %386 = memref.load %arg1[%384, %385] : memref<8x8xi32, #tpu.memory_space<smem>>
    %387 = arith.index_cast %386 : i32 to index
    %c0_141 = arith.constant 0 : index
    %388 = vector.load %arg2[%387, %c0_141] : memref<32x128xf32, #tpu.memory_space<vmem>>, vector<1x128xf32>
    %389 = arith.addf %383, %388 : vector<1x128xf32>
    %c5_i32_142 = arith.constant 5 : i32
    %390 = arith.index_cast %358 : i32 to index
    %391 = arith.index_cast %c5_i32_142 : i32 to index
    %392 = memref.load %arg1[%390, %391] : memref<8x8xi32, #tpu.memory_space<smem>>
    %393 = arith.index_cast %392 : i32 to index
    %c0_143 = arith.constant 0 : index
    %394 = vector.load %arg2[%393, %c0_143] : memref<32x128xf32, #tpu.memory_space<vmem>>, vector<1x128xf32>
    %395 = arith.addf %389, %394 : vector<1x128xf32>
    %c6_i32_144 = arith.constant 6 : i32
    %396 = arith.index_cast %358 : i32 to index
    %397 = arith.index_cast %c6_i32_144 : i32 to index
    %398 = memref.load %arg1[%396, %397] : memref<8x8xi32, #tpu.memory_space<smem>>
    %399 = arith.index_cast %398 : i32 to index
    %c0_145 = arith.constant 0 : index
    %400 = vector.load %arg2[%399, %c0_145] : memref<32x128xf32, #tpu.memory_space<vmem>>, vector<1x128xf32>
    %401 = arith.addf %395, %400 : vector<1x128xf32>
    %c7_i32_146 = arith.constant 7 : i32
    %402 = arith.index_cast %358 : i32 to index
    %403 = arith.index_cast %c7_i32_146 : i32 to index
    %404 = memref.load %arg1[%402, %403] : memref<8x8xi32, #tpu.memory_space<smem>>
    %405 = arith.index_cast %404 : i32 to index
    %c0_147 = arith.constant 0 : index
    %406 = vector.load %arg2[%405, %c0_147] : memref<32x128xf32, #tpu.memory_space<vmem>>, vector<1x128xf32>
    %407 = arith.addf %401, %406 : vector<1x128xf32>
    %c8_i32_148 = arith.constant 8 : i32
    %408 = tpu.concatenate %50, %101, %152, %203, %254, %305, %356, %407 in 0 : vector<1x128xf32>, vector<1x128xf32>, vector<1x128xf32>, vector<1x128xf32>, vector<1x128xf32>, vector<1x128xf32>, vector<1x128xf32>, vector<1x128xf32> -> vector<8x128xf32>
    %cst_149 = arith.constant 1.250000e-01 : f32
    %409 = vector.broadcast %cst_149 : f32 to vector<8x128xf32>
    %410 = arith.mulf %408, %409 : vector<8x128xf32>
    %411 = arith.truncf %410 : vector<8x128xf32> to vector<8x128xbf16>
    %c0_150 = arith.constant 0 : index
    %c0_151 = arith.constant 0 : index
    %412 = vector.load %arg3[%c0_150, %c0_151] : memref<128x384xbf16, #tpu.memory_space<vmem>>, vector<128x384xbf16>
    %cst_152 = arith.constant dense<0.000000e+00> : vector<8x384xf32>
    %413 = tpu.matmul %411, %412, %cst_152 {dimension_numbers = #tpu.dot_dimension_numbers<[1], [0], [0], [1], [0, 0, 1, 1], [], []>} : vector<8x128xbf16>, vector<128x384xbf16>, vector<8x384xf32> -> vector<8x384xf32>
    %c0_153 = arith.constant 0 : index
    %c0_154 = arith.constant 0 : index
    %414 = vector.load %arg4[%c0_153, %c0_154] : memref<1x384xf32, #tpu.memory_space<vmem>>, vector<1x384xf32>
    %415 = vector.broadcast %414 : vector<1x384xf32> to vector<8x384xf32>
    %416 = arith.addf %413, %415 : vector<8x384xf32>
    %417 = vector.extract_strided_slice %416 {offsets = [0, 0], sizes = [8, 128], strides = [1, 1]} : vector<8x384xf32> to vector<8x128xf32>
    %418 = arith.negf %417 : vector<8x128xf32>
    %419 = math.exp %418 : vector<8x128xf32>
    %cst_155 = arith.constant 1.000000e+00 : f32
    %420 = vector.broadcast %cst_155 : f32 to vector<8x128xf32>
    %421 = arith.addf %420, %419 : vector<8x128xf32>
    %422 = arith.divf %420, %421 : vector<8x128xf32>
    %423 = vector.extract_strided_slice %416 {offsets = [0, 128], sizes = [8, 128], strides = [1, 1]} : vector<8x384xf32> to vector<8x128xf32>
    %424 = arith.negf %423 : vector<8x128xf32>
    %425 = math.exp %424 : vector<8x128xf32>
    %cst_156 = arith.constant 1.000000e+00 : f32
    %426 = vector.broadcast %cst_156 : f32 to vector<8x128xf32>
    %427 = arith.addf %426, %425 : vector<8x128xf32>
    %428 = arith.divf %426, %427 : vector<8x128xf32>
    %429 = vector.extract_strided_slice %416 {offsets = [0, 256], sizes = [8, 128], strides = [1, 1]} : vector<8x384xf32> to vector<8x128xf32>
    %c0_157 = arith.constant 0 : index
    %c0_158 = arith.constant 0 : index
    %430 = vector.load %arg5[%c0_157, %c0_158] : memref<1x128xf32, #tpu.memory_space<vmem>>, vector<1x128xf32>
    %431 = vector.broadcast %430 : vector<1x128xf32> to vector<8x128xf32>
    %432 = arith.mulf %422, %431 : vector<8x128xf32>
    %433 = arith.addf %429, %432 : vector<8x128xf32>
    %434 = math.tanh %433 : vector<8x128xf32>
    %cst_159 = arith.constant 1.000000e+00 : f32
    %435 = vector.broadcast %cst_159 : f32 to vector<8x128xf32>
    %436 = arith.subf %435, %428 : vector<8x128xf32>
    %437 = arith.mulf %436, %434 : vector<8x128xf32>
    %438 = arith.truncf %437 : vector<8x128xf32> to vector<8x128xbf16>
    %c0_160 = arith.constant 0 : index
    %c0_161 = arith.constant 0 : index
    %439 = vector.load %arg6[%c0_160, %c0_161] : memref<128x128xbf16, #tpu.memory_space<vmem>>, vector<128x128xbf16>
    %cst_162 = arith.constant dense<0.000000e+00> : vector<8x128xf32>
    %440 = tpu.matmul %438, %439, %cst_162 {dimension_numbers = #tpu.dot_dimension_numbers<[1], [0], [0], [1], [0, 0, 1, 1], [], []>} : vector<8x128xbf16>, vector<128x128xbf16>, vector<8x128xf32> -> vector<8x128xf32>
    %c0_163 = arith.constant 0 : index
    %c0_164 = arith.constant 0 : index
    %441 = vector.load %arg7[%c0_163, %c0_164] : memref<1x128xf32, #tpu.memory_space<vmem>>, vector<1x128xf32>
    %442 = vector.broadcast %441 : vector<1x128xf32> to vector<8x128xf32>
    %443 = arith.addf %440, %442 : vector<8x128xf32>
    %c0_165 = arith.constant 0 : index
    %c0_166 = arith.constant 0 : index
    %444 = vector.load %arg8[%c0_165, %c0_166] : memref<8x128xf32, #tpu.memory_space<vmem>>, vector<8x128xf32>
    tpu.vector_store %arg8[%c0_165, %c0_166], %443 {strides = array<i32>} : memref<8x128xf32, #tpu.memory_space<vmem>>, vector<8x128xf32>,
    return
  }
  func.func @transform_0(%arg0: i32, %arg1: memref<8x8xi32, #tpu.memory_space<smem>>) -> (i32, i32) {
    %c0_i32 = arith.constant 0 : i32
    %c0_i32_0 = arith.constant 0 : i32
    %c0_i32_1 = arith.constant 0 : i32
    return %c0_i32, %c0_i32_0 : i32, i32
  }
  func.func @transform_1(%arg0: i32, %arg1: memref<8x8xi32, #tpu.memory_space<smem>>) -> (i32, i32) {
    %c0_i32 = arith.constant 0 : i32
    %c0_i32_0 = arith.constant 0 : i32
    %c0_i32_1 = arith.constant 0 : i32
    return %c0_i32, %c0_i32_0 : i32, i32
  }
  func.func @transform_2(%arg0: i32, %arg1: memref<8x8xi32, #tpu.memory_space<smem>>) -> (i32, i32) {
    %c0_i32 = arith.constant 0 : i32
    %c0_i32_0 = arith.constant 0 : i32
    %c0_i32_1 = arith.constant 0 : i32
    return %c0_i32, %c0_i32_0 : i32, i32
  }
  func.func @transform_3(%arg0: i32, %arg1: memref<8x8xi32, #tpu.memory_space<smem>>) -> (i32, i32) {
    %c0_i32 = arith.constant 0 : i32
    %c0_i32_0 = arith.constant 0 : i32
    %c0_i32_1 = arith.constant 0 : i32
    return %c0_i32, %c0_i32_0 : i32, i32
  }
  func.func @transform_4(%arg0: i32, %arg1: memref<8x8xi32, #tpu.memory_space<smem>>) -> (i32, i32) {
    %c0_i32 = arith.constant 0 : i32
    %c0_i32_0 = arith.constant 0 : i32
    %c0_i32_1 = arith.constant 0 : i32
    return %c0_i32, %c0_i32_0 : i32, i32
  }
  func.func @transform_5(%arg0: i32, %arg1: memref<8x8xi32, #tpu.memory_space<smem>>) -> (i32, i32) {
    %c0_i32 = arith.constant 0 : i32
    %c0_i32_0 = arith.constant 0 : i32
    %c0_i32_1 = arith.constant 0 : i32
    return %c0_i32, %c0_i32_0 : i32, i32
  }
  func.func @transform_6(%arg0: i32, %arg1: memref<8x8xi32, #tpu.memory_space<smem>>) -> (i32, i32) {
    %c0_i32 = arith.constant 0 : i32
    %c0_i32_0 = arith.constant 0 : i32
    return %arg0, %c0_i32 : i32, i32
  }
}

</mosaic_0001>

<llo_original>
// kernel: tpu_custom_call.1
$region0: #{tpu_custom_call.1}
  #allocation0 [shape = 'u32[]', space=smem, size = 0x4, offset = 0x4, fixed_abs, tag = 'smem constant byte address 0x4 - core index']
  #allocation1 [shape = 'u32[72,128]{1,0:T(1,128)}', space=vmem, size = 0x9000, scoped, tag = 'internal scratch']
  #allocation2 [shape = 's32[1]{0}', space=sflag, size = 0x4, scoped, tag = 'scoped memory for tpu_custom_call.1']
  #allocation3 [shape = 'u8[4096]{0}', space=smem, size = 0x1000, scoped, tag = 'prefetched SMEM operand 0']
  %s0 = inlined_call_operand.hbm [shape: s32[8,8], index: 0, kind: input, shape index: {}]
  %s1 = inlined_call_operand.hbm [shape: f32[32,128], index: 1, kind: input, shape index: {}]
  %s2 = inlined_call_operand.hbm [shape: bf16[128,384], index: 2, kind: input, shape index: {}]
  %s3 = inlined_call_operand.hbm [shape: f32[1,384], index: 3, kind: input, shape index: {}]
  %s4 = inlined_call_operand.vmem [shape: f32[1,128], index: 4, kind: input, shape index: {}]
  %s5 = inlined_call_operand.hbm [shape: bf16[128,128], index: 5, kind: input, shape index: {}]
  %s6 = inlined_call_operand.vmem [shape: f32[1,128], index: 6, kind: input, shape index: {}]
  %s7 = inlined_call_operand.hbm [shape: f32[8,128], index: 7, kind: output, shape index: {}]
  %s8 = sld [smem:[#allocation0]]
  $region50: #{tpu_custom_call.1} parent=0
    _
  %s10 = ssub.s32 1, %s8
  %s11 = scalar_select 0, %s10, %s8
  %s13 = sshll.u32 %s0, 4
  %s14 = int_to_ptr.hbm [resolvable:$true] %s13
  %16 = dma.hbm_to_smem %s14, 128, [#allocation3], [#allocation2]
  %18 = dma.done [#allocation2], 128
  %19 = sfence
  $region1: #{tpu_custom_call.1} parent=0
    #allocation4 [shape = 'u8[16384]{0}', space=vmem, size = 0x4000, scoped, tag = 'input window, operand 1, single buffered']
    #allocation5 [shape = 's32[1]{0}', space=sflag, size = 0x4, scoped, tag = 'scoped memory for tpu_custom_call.1']
    #allocation6 [shape = 's32[1]{0}', space=sflag, size = 0x4, scoped, tag = 'scoped memory for tpu_custom_call.1']
    #allocation7 [shape = 'u8[98304]{0}', space=vmem, size = 0x18000, scoped, tag = 'input window, operand 2, single buffered']
    #allocation8 [shape = 's32[1]{0}', space=sflag, size = 0x4, scoped, tag = 'scoped memory for tpu_custom_call.1']
    #allocation9 [shape = 'u8[1536]{0}', space=vmem, size = 0x800, scoped, tag = 'input window, operand 3, single buffered']
    #allocation10 [shape = 'u8[32768]{0}', space=vmem, size = 0x8000, scoped, tag = 'input window, operand 5, single buffered']
    #allocation11 [shape = 's32[1]{0}', space=sflag, size = 0x4, scoped, tag = 'scoped memory for tpu_custom_call.1']
    #allocation12 [shape = 'u8[4096]{0}', space=vmem, size = 0x1000, scoped, tag = 'output window, operand 0, single buffered']
    %20 = vsyncpa [#allocation5], 0
    %21 = vsyncpa [#allocation8], 0
    %22 = vsyncpa [#allocation11], 0
    %23 = vsyncpa [#allocation6], 0
    // Predicated region
    $region2: #{tpu_custom_call.1} parent=1 // pred_check
      _
    $region3: #{tpu_custom_call.1} parent=1 // pred_check_branch
      %25 = sbr.rel (0) target = $region5
    $region4: #{tpu_custom_call.1} parent=1 // pred_region
      %27 = vsyncadd [#allocation5], 0
      %s28 = sshll.u32 %s1, 4
      %s29 = int_to_ptr.hbm [resolvable:$true] %s28
      %s30 = sshll.u32 [#allocation4], 4
      %s31 = int_to_ptr.vmem [resolvable:$true] %s30
      %36 = dma.hbm_to_vmem [thread:$0]  %s29, 512, %s31, [#allocation5], 128, 128, 8
    $region5: #{tpu_custom_call.1} parent=1 // pred_fallthru
      _
    // Predicated region
    $region6: #{tpu_custom_call.1} parent=1 // pred_check
      _
    $region7: #{tpu_custom_call.1} parent=1 // pred_check_branch
      %38 = sbr.rel (0) target = $region9
    $region8: #{tpu_custom_call.1} parent=1 // pred_region
      %40 = vsyncadd [#allocation8], 0
      %s41 = sshll.u32 %s2, 4
      %s42 = int_to_ptr.hbm [resolvable:$true] %s41
      %s43 = sshll.u32 [#allocation7], 4
      %s44 = int_to_ptr.vmem [resolvable:$true] %s43
      %49 = dma.hbm_to_vmem [thread:$0]  %s42, 3072, %s44, [#allocation8], 192, 192, 12
    $region9: #{tpu_custom_call.1} parent=1 // pred_fallthru
      _
    // Predicated region
    $region10: #{tpu_custom_call.1} parent=1 // pred_check
      _
    $region11: #{tpu_custom_call.1} parent=1 // pred_check_branch
      %51 = sbr.rel (0) target = $region13
    $region12: #{tpu_custom_call.1} parent=1 // pred_region
      %53 = vsyncadd [#allocation8], 0
      %s55 = sshll.u32 %s3, 4
      %s56 = int_to_ptr.hbm [resolvable:$true] %s55
      %s57 = sshll.u32 [#allocation9], 4
      %s58 = int_to_ptr.vmem [resolvable:$true] %s57
      %60 = dma.hbm_to_vmem [thread:$0]  %s56, 48, %s58, [#allocation8]
    $region13: #{tpu_custom_call.1} parent=1 // pred_fallthru
      _
    // Predicated region
    $region14: #{tpu_custom_call.1} parent=1 // pred_check
      _
    $region15: #{tpu_custom_call.1} parent=1 // pred_check_branch
      %62 = sbr.rel (0) target = $region17
    $region16: #{tpu_custom_call.1} parent=1 // pred_region
      _
    $region17: #{tpu_custom_call.1} parent=1 // pred_fallthru
      _
    // Predicated region
    $region18: #{tpu_custom_call.1} parent=1 // pred_check
      _
    $region19: #{tpu_custom_call.1} parent=1 // pred_check_branch
      %64 = sbr.rel (0) target = $region21
    $region20: #{tpu_custom_call.1} parent=1 // pred_region
      %66 = vsyncadd [#allocation11], 0
      %s67 = sshll.u32 %s5, 4
      %s68 = int_to_ptr.hbm [resolvable:$true] %s67
      %s69 = sshll.u32 [#allocation10], 4
      %s70 = int_to_ptr.vmem [resolvable:$true] %s69
      %75 = dma.hbm_to_vmem [thread:$0]  %s68, 1024, %s70, [#allocation11], 64, 64, 4
    $region21: #{tpu_custom_call.1} parent=1 // pred_fallthru
      _
    // Predicated region
    $region22: #{tpu_custom_call.1} parent=1 // pred_check
      _
    $region23: #{tpu_custom_call.1} parent=1 // pred_check_branch
      %77 = sbr.rel (0) target = $region25
    $region24: #{tpu_custom_call.1} parent=1 // pred_region
      _
    $region25: #{tpu_custom_call.1} parent=1 // pred_fallthru
      _
    // Predicated region
    $region26: #{tpu_custom_call.1} parent=1 // pred_check
      _
    $region27: #{tpu_custom_call.1} parent=1 // pred_check_branch
      %79 = sbr.rel (0) target = $region29
    $region28: #{tpu_custom_call.1} parent=1 // pred_region
      %81 = dma.done [#allocation5], 512
    $region29: #{tpu_custom_call.1} parent=1 // pred_fallthru
      _
    // Predicated region
    $region30: #{tpu_custom_call.1} parent=1 // pred_check
      _
    $region31: #{tpu_custom_call.1} parent=1 // pred_check_branch
      %83 = sbr.rel (0) target = $region33
    $region32: #{tpu_custom_call.1} parent=1 // pred_region
      %85 = dma.done [#allocation8], 3072
    $region33: #{tpu_custom_call.1} parent=1 // pred_fallthru
      _
    // Predicated region
    $region34: #{tpu_custom_call.1} parent=1 // pred_check
      _
    $region35: #{tpu_custom_call.1} parent=1 // pred_check_branch
      %87 = sbr.rel (0) target = $region37
    $region36: #{tpu_custom_call.1} parent=1 // pred_region
      %89 = dma.done [#allocation8], 48
    $region37: #{tpu_custom_call.1} parent=1 // pred_fallthru
      _
    // Predicated region
    $region38: #{tpu_custom_call.1} parent=1 // pred_check
      _
    $region39: #{tpu_custom_call.1} parent=1 // pred_check_branch
      %91 = sbr.rel (0) target = $region41
    $region40: #{tpu_custom_call.1} parent=1 // pred_region
      %93 = dma.done [#allocation11], 1024
    $region41: #{tpu_custom_call.1} parent=1 // pred_fallthru
      _
    %s94 = smul.u32 0, 8
    %s95 = smul.u32 %s94, 128
    %s96 = sld [smem:[#allocation3 + %s95]]
    %s97 = scalar_lea.vmem [#allocation4], %s96
    %v98 = vld [vmem:[%s97] sm:$0x1]
    %v99 = vadd.f32 %v98, 0.0
    %s100 = sadd.s32 %s95, 1
    %s101 = sld [smem:[#allocation3 + %s100]]
    %s102 = scalar_lea.vmem [#allocation4], %s101
    %v103 = vld [vmem:[%s102] sm:$0x1]
    %v104 = vadd.f32 %v99, %v103
    %s105 = sadd.s32 %s95, 2
    %s106 = sld [smem:[#allocation3 + %s105]]
    %s107 = scalar_lea.vmem [#allocation4], %s106
    %v108 = vld [vmem:[%s107] sm:$0x1]
    %v109 = vadd.f32 %v104, %v108
    %s110 = sadd.s32 %s95, 3
    %s111 = sld [smem:[#allocation3 + %s110]]
    %s112 = scalar_lea.vmem [#allocation4], %s111
    %v113 = vld [vmem:[%s112] sm:$0x1]
    %v114 = vadd.f32 %v109, %v113
    %s115 = sadd.s32 %s95, 4
    %s116 = sld [smem:[#allocation3 + %s115]]
    %s117 = scalar_lea.vmem [#allocation4], %s116
    %v118 = vld [vmem:[%s117] sm:$0x1]
    %v119 = vadd.f32 %v114, %v118
    %s120 = sadd.s32 %s95, 5
    %s121 = sld [smem:[#allocation3 + %s120]]
    %s122 = scalar_lea.vmem [#allocation4], %s121
    %v123 = vld [vmem:[%s122] sm:$0x1]
    %v124 = vadd.f32 %v119, %v123
    %s125 = sadd.s32 %s95, 6
    %s126 = sld [smem:[#allocation3 + %s125]]
    %s127 = scalar_lea.vmem [#allocation4], %s126
    %v128 = vld [vmem:[%s127] sm:$0x1]
    %v129 = vadd.f32 %v124, %v128
    %s130 = sadd.s32 %s95, 7
    %s131 = sld [smem:[#allocation3 + %s130]]
    %s132 = scalar_lea.vmem [#allocation4], %s131
    %v133 = vld [vmem:[%s132] sm:$0x1]
    %v134 = vadd.f32 %v129, %v133
    %s135 = sadd.s32 %s94, 1
    %s136 = smul.u32 %s135, 128
    %s137 = sld [smem:[#allocation3 + %s136]]
    %s138 = scalar_lea.vmem [#allocation4], %s137
    %v139 = vld [vmem:[%s138] sm:$0x1]
    %v140 = vadd.f32 %v139, 0.0
    %s141 = sadd.s32 %s136, 1
    %s142 = sld [smem:[#allocation3 + %s141]]
    %s143 = scalar_lea.vmem [#allocation4], %s142
    %v144 = vld [vmem:[%s143] sm:$0x1]
    %v145 = vadd.f32 %v140, %v144
    %s146 = sadd.s32 %s136, 2
    %s147 = sld [smem:[#allocation3 + %s146]]
    %s148 = scalar_lea.vmem [#allocation4], %s147
    %v149 = vld [vmem:[%s148] sm:$0x1]
    %v150 = vadd.f32 %v145, %v149
    %s151 = sadd.s32 %s136, 3
    %s152 = sld [smem:[#allocation3 + %s151]]
    %s153 = scalar_lea.vmem [#allocation4], %s152
    %v154 = vld [vmem:[%s153] sm:$0x1]
    %v155 = vadd.f32 %v150, %v154
    %s156 = sadd.s32 %s136, 4
    %s157 = sld [smem:[#allocation3 + %s156]]
    %s158 = scalar_lea.vmem [#allocation4], %s157
    %v159 = vld [vmem:[%s158] sm:$0x1]
    %v160 = vadd.f32 %v155, %v159
    %s161 = sadd.s32 %s136, 5
    %s162 = sld [smem:[#allocation3 + %s161]]
    %s163 = scalar_lea.vmem [#allocation4], %s162
    %v164 = vld [vmem:[%s163] sm:$0x1]
    %v165 = vadd.f32 %v160, %v164
    %s166 = sadd.s32 %s136, 6
    %s167 = sld [smem:[#allocation3 + %s166]]
    %s168 = scalar_lea.vmem [#allocation4], %s167
    %v169 = vld [vmem:[%s168] sm:$0x1]
    %v170 = vadd.f32 %v165, %v169
    %s171 = sadd.s32 %s136, 7
    %s172 = sld [smem:[#allocation3 + %s171]]
    %s173 = scalar_lea.vmem [#allocation4], %s172
    %v174 = vld [vmem:[%s173] sm:$0x1]
    %v175 = vadd.f32 %v170, %v174
    %s176 = sadd.s32 %s94, 2
    %s177 = smul.u32 %s176, 128
    %s178 = sld [smem:[#allocation3 + %s177]]
    %s179 = scalar_lea.vmem [#allocation4], %s178
    %v180 = vld [vmem:[%s179] sm:$0x1]
    %v181 = vadd.f32 %v180, 0.0
    %s182 = sadd.s32 %s177, 1
    %s183 = sld [smem:[#allocation3 + %s182]]
    %s184 = scalar_lea.vmem [#allocation4], %s183
    %v185 = vld [vmem:[%s184] sm:$0x1]
    %v186 = vadd.f32 %v181, %v185
    %s187 = sadd.s32 %s177, 2
    %s188 = sld [smem:[#allocation3 + %s187]]
    %s189 = scalar_lea.vmem [#allocation4], %s188
    %v190 = vld [vmem:[%s189] sm:$0x1]
    %v191 = vadd.f32 %v186, %v190
    %s192 = sadd.s32 %s177, 3
    %s193 = sld [smem:[#allocation3 + %s192]]
    %s194 = scalar_lea.vmem [#allocation4], %s193
    %v195 = vld [vmem:[%s194] sm:$0x1]
    %v196 = vadd.f32 %v191, %v195
    %s197 = sadd.s32 %s177, 4
    %s198 = sld [smem:[#allocation3 + %s197]]
    %s199 = scalar_lea.vmem [#allocation4], %s198
    %v200 = vld [vmem:[%s199] sm:$0x1]
    %v201 = vadd.f32 %v196, %v200
    %s202 = sadd.s32 %s177, 5
    %s203 = sld [smem:[#allocation3 + %s202]]
    %s204 = scalar_lea.vmem [#allocation4], %s203
    %v205 = vld [vmem:[%s204] sm:$0x1]
    %v206 = vadd.f32 %v201, %v205
    %s207 = sadd.s32 %s177, 6
    %s208 = sld [smem:[#allocation3 + %s207]]
    %s209 = scalar_lea.vmem [#allocation4], %s208
    %v210 = vld [vmem:[%s209] sm:$0x1]
    %v211 = vadd.f32 %v206, %v210
    %s212 = sadd.s32 %s177, 7
    %s213 = sld [smem:[#allocation3 + %s212]]
    %s214 = scalar_lea.vmem [#allocation4], %s213
    %v215 = vld [vmem:[%s214] sm:$0x1]
    %v216 = vadd.f32 %v211, %v215
    %s217 = sadd.s32 %s94, 3
    %s218 = smul.u32 %s217, 128
    %s219 = sld [smem:[#allocation3 + %s218]]
    %s220 = scalar_lea.vmem [#allocation4], %s219
    %v221 = vld [vmem:[%s220] sm:$0x1]
    %v222 = vadd.f32 %v221, 0.0
    %s223 = sadd.s32 %s218, 1
    %s224 = sld [smem:[#allocation3 + %s223]]
    %s225 = scalar_lea.vmem [#allocation4], %s224
    %v226 = vld [vmem:[%s225] sm:$0x1]
    %v227 = vadd.f32 %v222, %v226
    %s228 = sadd.s32 %s218, 2
    %s229 = sld [smem:[#allocation3 + %s228]]
    %s230 = scalar_lea.vmem [#allocation4], %s229
    %v231 = vld [vmem:[%s230] sm:$0x1]
    %v232 = vadd.f32 %v227, %v231
    %s233 = sadd.s32 %s218, 3
    %s234 = sld [smem:[#allocation3 + %s233]]
    %s235 = scalar_lea.vmem [#allocation4], %s234
    %v236 = vld [vmem:[%s235] sm:$0x1]
    %v237 = vadd.f32 %v232, %v236
    %s238 = sadd.s32 %s218, 4
    %s239 = sld [smem:[#allocation3 + %s238]]
    %s240 = scalar_lea.vmem [#allocation4], %s239
    %v241 = vld [vmem:[%s240] sm:$0x1]
    %v242 = vadd.f32 %v237, %v241
    %s243 = sadd.s32 %s218, 5
    %s244 = sld [smem:[#allocation3 + %s243]]
    %s245 = scalar_lea.vmem [#allocation4], %s244
    %v246 = vld [vmem:[%s245] sm:$0x1]
    %v247 = vadd.f32 %v242, %v246
    %s248 = sadd.s32 %s218, 6
    %s249 = sld [smem:[#allocation3 + %s248]]
    %s250 = scalar_lea.vmem [#allocation4], %s249
    %v251 = vld [vmem:[%s250] sm:$0x1]
    %v252 = vadd.f32 %v247, %v251
    %s253 = sadd.s32 %s218, 7
    %s254 = sld [smem:[#allocation3 + %s253]]
    %s255 = scalar_lea.vmem [#allocation4], %s254
    %v256 = vld [vmem:[%s255] sm:$0x1]
    %v257 = vadd.f32 %v252, %v256
    %s258 = sadd.s32 %s94, 4
    %s259 = smul.u32 %s258, 128
    %s260 = sld [smem:[#allocation3 + %s259]]
    %s261 = scalar_lea.vmem [#allocation4], %s260
    %v262 = vld [vmem:[%s261] sm:$0x1]
    %v263 = vadd.f32 %v262, 0.0
    %s264 = sadd.s32 %s259, 1
    %s265 = sld [smem:[#allocation3 + %s264]]
    %s266 = scalar_lea.vmem [#allocation4], %s265
    %v267 = vld [vmem:[%s266] sm:$0x1]
    %v268 = vadd.f32 %v263, %v267
    %s269 = sadd.s32 %s259, 2
    %s270 = sld [smem:[#allocation3 + %s269]]
    %s271 = scalar_lea.vmem [#allocation4], %s270
    %v272 = vld [vmem:[%s271] sm:$0x1]
    %v273 = vadd.f32 %v268, %v272
    %s274 = sadd.s32 %s259, 3
    %s275 = sld [smem:[#allocation3 + %s274]]
    %s276 = scalar_lea.vmem [#allocation4], %s275
    %v277 = vld [vmem:[%s276] sm:$0x1]
    %v278 = vadd.f32 %v273, %v277
    %s279 = sadd.s32 %s259, 4
    %s280 = sld [smem:[#allocation3 + %s279]]
    %s281 = scalar_lea.vmem [#allocation4], %s280
    %v282 = vld [vmem:[%s281] sm:$0x1]
    %v283 = vadd.f32 %v278, %v282
    %s284 = sadd.s32 %s259, 5
    %s285 = sld [smem:[#allocation3 + %s284]]
    %s286 = scalar_lea.vmem [#allocation4], %s285
    %v287 = vld [vmem:[%s286] sm:$0x1]
    %v288 = vadd.f32 %v283, %v287
    %s289 = sadd.s32 %s259, 6
    %s290 = sld [smem:[#allocation3 + %s289]]
    %s291 = scalar_lea.vmem [#allocation4], %s290
    %v292 = vld [vmem:[%s291] sm:$0x1]
    %v293 = vadd.f32 %v288, %v292
    %s294 = sadd.s32 %s259, 7
    %s295 = sld [smem:[#allocation3 + %s294]]
    %s296 = scalar_lea.vmem [#allocation4], %s295
    %v297 = vld [vmem:[%s296] sm:$0x1]
    %v298 = vadd.f32 %v293, %v297
    %s299 = sadd.s32 %s94, 5
    %s300 = smul.u32 %s299, 128
    %s301 = sld [smem:[#allocation3 + %s300]]
    %s302 = scalar_lea.vmem [#allocation4], %s301
    %v303 = vld [vmem:[%s302] sm:$0x1]
    %v304 = vadd.f32 %v303, 0.0
    %s305 = sadd.s32 %s300, 1
    %s306 = sld [smem:[#allocation3 + %s305]]
    %s307 = scalar_lea.vmem [#allocation4], %s306
    %v308 = vld [vmem:[%s307] sm:$0x1]
    %v309 = vadd.f32 %v304, %v308
    %s310 = sadd.s32 %s300, 2
    %s311 = sld [smem:[#allocation3 + %s310]]
    %s312 = scalar_lea.vmem [#allocation4], %s311
    %v313 = vld [vmem:[%s312] sm:$0x1]
    %v314 = vadd.f32 %v309, %v313
    %s315 = sadd.s32 %s300, 3
    %s316 = sld [smem:[#allocation3 + %s315]]
    %s317 = scalar_lea.vmem [#allocation4], %s316
    %v318 = vld [vmem:[%s317] sm:$0x1]
    %v319 = vadd.f32 %v314, %v318
    %s320 = sadd.s32 %s300, 4
    %s321 = sld [smem:[#allocation3 + %s320]]
    %s322 = scalar_lea.vmem [#allocation4], %s321
    %v323 = vld [vmem:[%s322] sm:$0x1]
    %v324 = vadd.f32 %v319, %v323
    %s325 = sadd.s32 %s300, 5
    %s326 = sld [smem:[#allocation3 + %s325]]
    %s327 = scalar_lea.vmem [#allocation4], %s326
    %v328 = vld [vmem:[%s327] sm:$0x1]
    %v329 = vadd.f32 %v324, %v328
    %s330 = sadd.s32 %s300, 6
    %s331 = sld [smem:[#allocation3 + %s330]]
    %s332 = scalar_lea.vmem [#allocation4], %s331
    %v333 = vld [vmem:[%s332] sm:$0x1]
    %v334 = vadd.f32 %v329, %v333
    %s335 = sadd.s32 %s300, 7
    %s336 = sld [smem:[#allocation3 + %s335]]
    %s337 = scalar_lea.vmem [#allocation4], %s336
    %v338 = vld [vmem:[%s337] sm:$0x1]
    %v339 = vadd.f32 %v334, %v338
    %s340 = sadd.s32 %s94, 6
    %s341 = smul.u32 %s340, 128
    %s342 = sld [smem:[#allocation3 + %s341]]
    %s343 = scalar_lea.vmem [#allocation4], %s342
    %v344 = vld [vmem:[%s343] sm:$0x1]
    %v345 = vadd.f32 %v344, 0.0
    %s346 = sadd.s32 %s341, 1
    %s347 = sld [smem:[#allocation3 + %s346]]
    %s348 = scalar_lea.vmem [#allocation4], %s347
    %v349 = vld [vmem:[%s348] sm:$0x1]
    %v350 = vadd.f32 %v345, %v349
    %s351 = sadd.s32 %s341, 2
    %s352 = sld [smem:[#allocation3 + %s351]]
    %s353 = scalar_lea.vmem [#allocation4], %s352
    %v354 = vld [vmem:[%s353] sm:$0x1]
    %v355 = vadd.f32 %v350, %v354
    %s356 = sadd.s32 %s341, 3
    %s357 = sld [smem:[#allocation3 + %s356]]
    %s358 = scalar_lea.vmem [#allocation4], %s357
    %v359 = vld [vmem:[%s358] sm:$0x1]
    %v360 = vadd.f32 %v355, %v359
    %s361 = sadd.s32 %s341, 4
    %s362 = sld [smem:[#allocation3 + %s361]]
    %s363 = scalar_lea.vmem [#allocation4], %s362
    %v364 = vld [vmem:[%s363] sm:$0x1]
    %v365 = vadd.f32 %v360, %v364
    %s366 = sadd.s32 %s341, 5
    %s367 = sld [smem:[#allocation3 + %s366]]
    %s368 = scalar_lea.vmem [#allocation4], %s367
    %v369 = vld [vmem:[%s368] sm:$0x1]
    %v370 = vadd.f32 %v365, %v369
    %s371 = sadd.s32 %s341, 6
    %s372 = sld [smem:[#allocation3 + %s371]]
    %s373 = scalar_lea.vmem [#allocation4], %s372
    %v374 = vld [vmem:[%s373] sm:$0x1]
    %v375 = vadd.f32 %v370, %v374
    %s376 = sadd.s32 %s341, 7
    %s377 = sld [smem:[#allocation3 + %s376]]
    %s378 = scalar_lea.vmem [#allocation4], %s377
    %v379 = vld [vmem:[%s378] sm:$0x1]
    %v380 = vadd.f32 %v375, %v379
    %s381 = sadd.s32 %s94, 7
    %s382 = smul.u32 %s381, 128
    %s383 = sld [smem:[#allocation3 + %s382]]
    %s384 = scalar_lea.vmem [#allocation4], %s383
    %v385 = vld [vmem:[%s384] sm:$0x1]
    %v386 = vadd.f32 %v385, 0.0
    %s387 = sadd.s32 %s382, 1
    %s388 = sld [smem:[#allocation3 + %s387]]
    %s389 = scalar_lea.vmem [#allocation4], %s388
    %v390 = vld [vmem:[%s389] sm:$0x1]
    %v391 = vadd.f32 %v386, %v390
    %s392 = sadd.s32 %s382, 2
    %s393 = sld [smem:[#allocation3 + %s392]]
    %s394 = scalar_lea.vmem [#allocation4], %s393
    %v395 = vld [vmem:[%s394] sm:$0x1]
    %v396 = vadd.f32 %v391, %v395
    %s397 = sadd.s32 %s382, 3
    %s398 = sld [smem:[#allocation3 + %s397]]
    %s399 = scalar_lea.vmem [#allocation4], %s398
    %v400 = vld [vmem:[%s399] sm:$0x1]
    %v401 = vadd.f32 %v396, %v400
    %s402 = sadd.s32 %s382, 4
    %s403 = sld [smem:[#allocation3 + %s402]]
    %s404 = scalar_lea.vmem [#allocation4], %s403
    %v405 = vld [vmem:[%s404] sm:$0x1]
    %v406 = vadd.f32 %v401, %v405
    %s407 = sadd.s32 %s382, 5
    %s408 = sld [smem:[#allocation3 + %s407]]
    %s409 = scalar_lea.vmem [#allocation4], %s408
    %v410 = vld [vmem:[%s409] sm:$0x1]
    %v411 = vadd.f32 %v406, %v410
    %s412 = sadd.s32 %s382, 6
    %s413 = sld [smem:[#allocation3 + %s412]]
    %s414 = scalar_lea.vmem [#allocation4], %s413
    %v415 = vld [vmem:[%s414] sm:$0x1]
    %v416 = vadd.f32 %v411, %v415
    %s417 = sadd.s32 %s382, 7
    %s418 = sld [smem:[#allocation3 + %s417]]
    %s419 = scalar_lea.vmem [#allocation4], %s418
    %v420 = vld [vmem:[%s419] sm:$0x1]
    %v421 = vadd.f32 %v416, %v420
    %v423 = vrot.slane %v175, 7
    %v426 = vrot.slane %v216, 6
    %v429 = vrot.slane %v257, 5
    %v432 = vrot.slane %v298, 4
    %v435 = vrot.slane %v339, 3
    %v438 = vrot.slane %v380, 2
    %v441 = vrot.slane %v421, 1
    %vm443 = vcmask 1040384
    %v444 = vsel %vm443, %v134, %v423
    %vm445 = vcmask 1041408
    %v446 = vsel %vm445, %v444, %v426
    %vm447 = vcmask 1042432
    %v448 = vsel %vm447, %v446, %v429
    %vm449 = vcmask 1043456
    %v450 = vsel %vm449, %v448, %v432
    %vm451 = vcmask 1044480
    %v452 = vsel %vm451, %v450, %v435
    %vm453 = vcmask 1045504
    %v454 = vsel %vm453, %v452, %v438
    %vm455 = vcmask 1046528
    %v456 = vsel %vm455, %v454, %v441
    %v457 = vmul.f32 %v456, 0.125
    %v458 = vpack.c.bf16 %v457, %v457
    %v459 = vld [vmem:[#allocation7] sm:$0xff]
    %v460 = vld [vmem:[#allocation7 + $0x8] sm:$0xf]
    %v461 = vld [vmem:[#allocation7 + $0xc] sm:$0xff]
    %v462 = vld [vmem:[#allocation7 + $0x14] sm:$0xf]
    %v463 = vld [vmem:[#allocation7 + $0x18] sm:$0xff]
    %v464 = vld [vmem:[#allocation7 + $0x20] sm:$0xf]
    %v465 = vld [vmem:[#allocation7 + $0x24] sm:$0xff]
    %v466 = vld [vmem:[#allocation7 + $0x2c] sm:$0xf]
    %v467 = vld [vmem:[#allocation7 + $0x30] sm:$0xff]
    %v468 = vld [vmem:[#allocation7 + $0x38] sm:$0xf]
    %v469 = vld [vmem:[#allocation7 + $0x3c] sm:$0xff]
    %v470 = vld [vmem:[#allocation7 + $0x44] sm:$0xf]
    %v471 = vld [vmem:[#allocation7 + $0x48] sm:$0xff]
    %v472 = vld [vmem:[#allocation7 + $0x50] sm:$0xf]
    %v473 = vld [vmem:[#allocation7 + $0x54] sm:$0xff]
    %v474 = vld [vmem:[#allocation7 + $0x5c] sm:$0xf]
    %v475 = vld [vmem:[#allocation7 + $0x60] sm:$0xff]
    %v476 = vld [vmem:[#allocation7 + $0x68] sm:$0xf]
    %v477 = vld [vmem:[#allocation7 + $0x6c] sm:$0xff]
    %v478 = vld [vmem:[#allocation7 + $0x74] sm:$0xf]
    %v479 = vld [vmem:[#allocation7 + $0x78] sm:$0xff]
    %v480 = vld [vmem:[#allocation7 + $0x80] sm:$0xf]
    %v481 = vld [vmem:[#allocation7 + $0x84] sm:$0xff]
    %v482 = vld [vmem:[#allocation7 + $0x8c] sm:$0xf]
    %v483 = vld [vmem:[#allocation7 + $0x90] sm:$0xff]
    %v484 = vld [vmem:[#allocation7 + $0x98] sm:$0xf]
    %v485 = vld [vmem:[#allocation7 + $0x9c] sm:$0xff]
    %v486 = vld [vmem:[#allocation7 + $0xa4] sm:$0xf]
    %v487 = vld [vmem:[#allocation7 + $0xa8] sm:$0xff]
    %v488 = vld [vmem:[#allocation7 + $0xb0] sm:$0xf]
    %v489 = vld [vmem:[#allocation7 + $0xb4] sm:$0xff]
    %v490 = vld [vmem:[#allocation7 + $0xbc] sm:$0xf]
    %v491 = vld [vmem:[#allocation9] sm:$0x7]
    %v493 = vperm.slane %v491, 0
    %v494 = vperm.slane %v491, 1
    %v495 = vperm.slane %v491, 2
    %v531 = vunpack.c.l.b16 %v459
    %v532 = vunpack.c.h.b16 %v459
    %v533 = vunpack.c.l.b16 %v460
    %v534 = vunpack.c.l.b16 %v461
    %v535 = vunpack.c.h.b16 %v461
    %v536 = vunpack.c.l.b16 %v462
    %v537 = vunpack.c.l.b16 %v463
    %v538 = vunpack.c.h.b16 %v463
    %v539 = vunpack.c.l.b16 %v464
    %v540 = vunpack.c.l.b16 %v465
    %v541 = vunpack.c.h.b16 %v465
    %v542 = vunpack.c.l.b16 %v466
    %v543 = vunpack.c.l.b16 %v467
    %v544 = vunpack.c.h.b16 %v467
    %v545 = vunpack.c.l.b16 %v468
    %v546 = vunpack.c.l.b16 %v469
    %v547 = vunpack.c.h.b16 %v469
    %v548 = vunpack.c.l.b16 %v470
    %v549 = vunpack.c.l.b16 %v471
    %v550 = vunpack.c.h.b16 %v471
    %v551 = vunpack.c.l.b16 %v472
    %v552 = vunpack.c.l.b16 %v473
    %v553 = vunpack.c.h.b16 %v473
    %v554 = vunpack.c.l.b16 %v474
    %v555 = vunpack.c.l.b16 %v475
    %v556 = vunpack.c.h.b16 %v475
    %v557 = vunpack.c.l.b16 %v476
    %v558 = vunpack.c.l.b16 %v477
    %v559 = vunpack.c.h.b16 %v477
    %v560 = vunpack.c.l.b16 %v478
    %v561 = vunpack.c.l.b16 %v479
    %v562 = vunpack.c.h.b16 %v479
    %v563 = vunpack.c.l.b16 %v480
    %v564 = vunpack.c.l.b16 %v481
    %v565 = vunpack.c.h.b16 %v481
    %v566 = vunpack.c.l.b16 %v482
    %v567 = vunpack.c.l.b16 %v483
    %v568 = vunpack.c.h.b16 %v483
    %v569 = vunpack.c.l.b16 %v484
    %v570 = vunpack.c.l.b16 %v485
    %v571 = vunpack.c.h.b16 %v485
    %v572 = vunpack.c.l.b16 %v486
    %v573 = vunpack.c.l.b16 %v487
    %v574 = vunpack.c.h.b16 %v487
    %v575 = vunpack.c.l.b16 %v488
    %v576 = vunpack.c.l.b16 %v489
    %v577 = vunpack.c.h.b16 %v489
    %v578 = vunpack.c.l.b16 %v490
    %v579 = vpack.c.b16 %v534, %v531
    %v580 = vpack.c.b16 %v535, %v532
    %v581 = vpack.c.b16 %v536, %v533
    %v582 = vpack.c.b16 %v540, %v537
    %v583 = vpack.c.b16 %v541, %v538
    %v584 = vpack.c.b16 %v542, %v539
    %v585 = vpack.c.b16 %v546, %v543
    %v586 = vpack.c.b16 %v547, %v544
    %v587 = vpack.c.b16 %v548, %v545
    %v588 = vpack.c.b16 %v552, %v549
    %v589 = vpack.c.b16 %v553, %v550
    %v590 = vpack.c.b16 %v554, %v551
    %v591 = vpack.c.b16 %v558, %v555
    %v592 = vpack.c.b16 %v559, %v556
    %v593 = vpack.c.b16 %v560, %v557
    %v594 = vpack.c.b16 %v564, %v561
    %v595 = vpack.c.b16 %v565, %v562
    %v596 = vpack.c.b16 %v566, %v563
    %v597 = vpack.c.b16 %v570, %v567
    %v598 = vpack.c.b16 %v571, %v568
    %v599 = vpack.c.b16 %v572, %v569
    %v600 = vpack.c.b16 %v576, %v573
    %v601 = vpack.c.b16 %v577, %v574
    %v602 = vpack.c.b16 %v578, %v575
    %627 = vmatpush.bf16.msra.mxu0 %v600
    %628 = vmatpush.bf16.msra.mxu0 %v597
    %629 = vmatpush.bf16.msra.mxu0 %v594
    %630 = vmatpush.bf16.msra.mxu0 %v591
    %631 = vmatpush.bf16.msra.mxu0 %v588
    %632 = vmatpush.bf16.msra.mxu0 %v585
    %633 = vmatpush.bf16.msra.mxu0 %v582
    %634 = vmatpush.bf16.msra.mxu0 %v579
    %635 = vmatmul.bf16.gmra.mxu0 %v458
    %v636 = vpop.f32.mrf.mxu0
    %v637 = vadd.f32 %v493, %v636
    %v638 = vpop.f32.mrf.mxu0
    %639 = vdwg.mxu0
    %640 = vmatpush.bf16.msra.mxu0 %v601
    %641 = vmatpush.bf16.msra.mxu0 %v598
    %642 = vmatpush.bf16.msra.mxu0 %v595
    %643 = vmatpush.bf16.msra.mxu0 %v592
    %644 = vmatpush.bf16.msra.mxu0 %v589
    %645 = vmatpush.bf16.msra.mxu0 %v586
    %646 = vmatpush.bf16.msra.mxu0 %v583
    %647 = vmatpush.bf16.msra.mxu0 %v580
    %648 = vmatmul.bf16.gmra.mxu0 %v458
    %v649 = vpop.f32.mrf.mxu0
    %v650 = vadd.f32 %v494, %v649
    %v651 = vpop.f32.mrf.mxu0
    %652 = vdwg.mxu0
    %653 = vmatpush.bf16.msra.mxu0 %v602
    %654 = vmatpush.bf16.msra.mxu0 %v599
    %655 = vmatpush.bf16.msra.mxu0 %v596
    %656 = vmatpush.bf16.msra.mxu0 %v593
    %657 = vmatpush.bf16.msra.mxu0 %v590
    %658 = vmatpush.bf16.msra.mxu0 %v587
    %659 = vmatpush.bf16.msra.mxu0 %v584
    %660 = vmatpush.bf16.msra.mxu0 %v581
    %661 = vmatmul.bf16.gmra.mxu0 %v458
    %v662 = vpop.f32.mrf.mxu0
    %v663 = vadd.f32 %v495, %v662
    %v664 = vpop.f32.mrf.mxu0
    %665 = vdwg.mxu0
    %v666 = vxor.u32 %v637, 2147483648
    %v667 = vmul.f32 %v666, 1.442695
    %v668 = vpow.pop %v667
    %v669 = vadd.f32 %v668, 1.0
    %v670 = vrcp.pop %v669
    %v671 = vmul.f32 %v669, %v670
    %v672 = vsub.f32 1.0, %v671
    %v673 = vmul.f32 %v670, %v672
    %v674 = vadd.f32 %v670, %v673
    %vm675 = vweird.f32 %v669
    %vm676 = vweird.f32 %v670
    %vm677 = vmor %vm675, %vm676
    %v678 = vsel %vm677, %v670, %v674
    %v679 = vand.u32 2147483647, %v669
    %vm680 = vcmp.eq.f32.partialorder %v679, 8.507059e+37
    %v681 = vand.u32 %v669, 2147483648
    %v682 = vor.u32 1.1754944e-38, %v681
    %v683 = vsel %vm680, %v682, %v678
    %v684 = vmul.f32 1.0, %v683
    %v685 = vxor.u32 %v650, 2147483648
    %v686 = vmul.f32 %v685, 1.442695
    %v687 = vpow.pop %v686
    %v688 = vadd.f32 %v687, 1.0
    %v689 = vrcp.pop %v688
    %v690 = vmul.f32 %v688, %v689
    %v691 = vsub.f32 1.0, %v690
    %v692 = vmul.f32 %v689, %v691
    %v693 = vadd.f32 %v689, %v692
    %vm694 = vweird.f32 %v688
    %vm695 = vweird.f32 %v689
    %vm696 = vmor %vm694, %vm695
    %v697 = vsel %vm696, %v689, %v693
    %v698 = vand.u32 2147483647, %v688
    %vm699 = vcmp.eq.f32.partialorder %v698, 8.507059e+37
    %v700 = vand.u32 %v688, 2147483648
    %v701 = vor.u32 1.1754944e-38, %v700
    %v702 = vsel %vm699, %v701, %v697
    %v703 = vmul.f32 1.0, %v702
    %v704 = vld [vmem:[%s4] sm:$0x1]
    %v706 = vperm.slane %v704, 0
    %v708 = vmul.f32 %v684, %v706
    %v709 = vadd.f32 %v663, %v708
    %v710 = vtanh.pop %v709
    %v711 = vsub.f32 1.0, %v703
    %v712 = vmul.f32 %v711, %v710
    %v713 = vpack.c.bf16 %v712, %v712
    %v714 = vld [vmem:[#allocation10] sm:$0xf]
    %v715 = vld [vmem:[#allocation10 + $0x4] sm:$0xf]
    %v716 = vld [vmem:[#allocation10 + $0x8] sm:$0xf]
    %v717 = vld [vmem:[#allocation10 + $0xc] sm:$0xf]
    %v718 = vld [vmem:[#allocation10 + $0x10] sm:$0xf]
    %v719 = vld [vmem:[#allocation10 + $0x14] sm:$0xf]
    %v720 = vld [vmem:[#allocation10 + $0x18] sm:$0xf]
    %v721 = vld [vmem:[#allocation10 + $0x1c] sm:$0xf]
    %v722 = vld [vmem:[#allocation10 + $0x20] sm:$0xf]
    %v723 = vld [vmem:[#allocation10 + $0x24] sm:$0xf]
    %v724 = vld [vmem:[#allocation10 + $0x28] sm:$0xf]
    %v725 = vld [vmem:[#allocation10 + $0x2c] sm:$0xf]
    %v726 = vld [vmem:[#allocation10 + $0x30] sm:$0xf]
    %v727 = vld [vmem:[#allocation10 + $0x34] sm:$0xf]
    %v728 = vld [vmem:[#allocation10 + $0x38] sm:$0xf]
    %v729 = vld [vmem:[#allocation10 + $0x3c] sm:$0xf]
    %v730 = vld [vmem:[%s6] sm:$0x1]
    %v732 = vperm.slane %v730, 0
    %v750 = vunpack.c.l.b16 %v714
    %v751 = vunpack.c.l.b16 %v715
    %v752 = vunpack.c.l.b16 %v716
    %v753 = vunpack.c.l.b16 %v717
    %v754 = vunpack.c.l.b16 %v718
    %v755 = vunpack.c.l.b16 %v719
    %v756 = vunpack.c.l.b16 %v720
    %v757 = vunpack.c.l.b16 %v721
    %v758 = vunpack.c.l.b16 %v722
    %v759 = vunpack.c.l.b16 %v723
    %v760 = vunpack.c.l.b16 %v724
    %v761 = vunpack.c.l.b16 %v725
    %v762 = vunpack.c.l.b16 %v726
    %v763 = vunpack.c.l.b16 %v727
    %v764 = vunpack.c.l.b16 %v728
    %v765 = vunpack.c.l.b16 %v729
    %v766 = vpack.c.b16 %v751, %v750
    %v767 = vpack.c.b16 %v753, %v752
    %v768 = vpack.c.b16 %v755, %v754
    %v769 = vpack.c.b16 %v757, %v756
    %v770 = vpack.c.b16 %v759, %v758
    %v771 = vpack.c.b16 %v761, %v760
    %v772 = vpack.c.b16 %v763, %v762
    %v773 = vpack.c.b16 %v765, %v764
    %782 = vmatpush.bf16.msra.mxu0 %v773
    %783 = vmatpush.bf16.msra.mxu0 %v772
    %784 = vmatpush.bf16.msra.mxu0 %v771
    %785 = vmatpush.bf16.msra.mxu0 %v770
    %786 = vmatpush.bf16.msra.mxu0 %v769
    %787 = vmatpush.bf16.msra.mxu0 %v768
    %788 = vmatpush.bf16.msra.mxu0 %v767
    %789 = vmatpush.bf16.msra.mxu0 %v766
    %790 = vmatmul.bf16.gmra.mxu0 %v713
    %v791 = vpop.f32.mrf.mxu0
    %v792 = vadd.f32 %v732, %v791
    %v793 = vpop.f32.mrf.mxu0
    %794 = vdwg.mxu0
    %795 = vst [vmem:[#allocation12] sm:$0xff] %v792
    // Predicated region
    $region42: #{tpu_custom_call.1} parent=1 // pred_check
      _
    $region43: #{tpu_custom_call.1} parent=1 // pred_check_branch
      %797 = sbr.rel (0) target = $region45
    $region44: #{tpu_custom_call.1} parent=1 // pred_region
      %799 = vsyncadd [#allocation6], 0
      %s801 = sshll.u32 [#allocation12], 4
      %s802 = int_to_ptr.vmem [resolvable:$true] %s801
      %s803 = sshll.u32 %s7, 4
      %s804 = int_to_ptr.hbm [resolvable:$true] %s803
      %806 = dma.vmem_to_hbm [thread:$0]  %s802, 128, %s804, [#allocation6]
    $region45: #{tpu_custom_call.1} parent=1 // pred_fallthru
      _
    // Predicated region
    $region46: #{tpu_custom_call.1} parent=1 // pred_check
      _
    $region47: #{tpu_custom_call.1} parent=1 // pred_check_branch
      %808 = sbr.rel (0) target = $region49
    $region48: #{tpu_custom_call.1} parent=1 // pred_region
      %810 = dma.done [#allocation6], 128
    $region49: #{tpu_custom_call.1} parent=1 // pred_fallthru
      _
    %811 = vsyncpa [#allocation5], 1
    %812 = vsyncpa [#allocation8], 1
    %813 = vsyncpa [#allocation11], 1
    %814 = vsyncpa [#allocation6], 1

</llo_original>
